<compile_context>
chip_gen: v6e
topology: v6e:2x2x1
jax: 0.10.0
libtpu: 0.0.40
codegen_flags: <defaults>
</compile_context>

<pallas_src>
import functools

import jax
import jax.numpy as jnp
from jax.experimental import pallas as pl
from jax.experimental.pallas import tpu as pltpu


def _round_up(x: int, m: int) -> int:
    return ((x + m - 1) // m) * m


# ----------------------------------------------------------------------------
# Pallas kernel: the whole post-gather NeuMF forward for one batch tile, in
# the transposed (features-on-sublanes, batch-on-lanes) layout.
# ----------------------------------------------------------------------------
def neumf_kernel(
    u_ref, i_ref,              # (d_emb, TM) bf16 gathered embeddings [mlp | mf]
    w1u_ref, w1i_ref, b1_ref,  # (L1, d_emb) bf16 (mf cols zeroed) x2, (L1, 1) f32
    w2_ref, b2_ref,            # (L2, L1) bf16, (L2, 1) f32
    w3_ref, b3_ref,            # (L3, L2) bf16, (L3, 1) f32
    wah_ref, wam_ref, ba_ref,  # (1, L3) f32, (1, d_emb) f32 (mlp rows zeroed), (1, 1) f32
    out_ref,                   # (1, TM) f32 -- lane-dense ratings row
):
    u = u_ref[...]
    i = i_ref[...]

    # MLP tower: h^T = W^T @ x^T.  Layer 1 is concat-free: the user/item
    # halves feed the same f32 accumulator; the zero-padded mf columns of
    # w1u/w1i make the full-d_emb contraction exact (no value slicing).
    h = jnp.dot(w1u_ref[...], u, preferred_element_type=jnp.float32)
    h = h + jnp.dot(w1i_ref[...], i, preferred_element_type=jnp.float32)
    h = jnp.maximum(h + b1_ref[...], 0.0)

    h = jnp.dot(w2_ref[...], h.astype(jnp.bfloat16),
                preferred_element_type=jnp.float32)
    h = jnp.maximum(h + b2_ref[...], 0.0)

    h = jnp.dot(w3_ref[...], h.astype(jnp.bfloat16),
                preferred_element_type=jnp.float32)
    h = jnp.maximum(h + b3_ref[...], 0.0)                 # (L3, TM) f32

    # GMF branch: element-wise product in f32 (v5e VPU/EUP have no bf16 path).
    mf = u.astype(jnp.float32) * i.astype(jnp.float32)     # (d_emb, TM)

    # Affine head: two M=1 f32 matmuls on the idle MXU produce the logits as
    # a lane-dense (1, TM) row directly.  wam is zero over the mlp feature
    # rows, so no slicing / relayout of `mf` is needed.
    logits = (
        jnp.dot(wah_ref[...], h, preferred_element_type=jnp.float32)
        + jnp.dot(wam_ref[...], mf, preferred_element_type=jnp.float32)
        + ba_ref[...]
    )
    out_ref[...] = jax.nn.sigmoid(logits)


# ----------------------------------------------------------------------------
# Parameter initialization (mirrors NeuMF.init_weight, deterministic).
# ----------------------------------------------------------------------------
def xavier_uniform(key, fan_in, fan_out):
    bound = (6.0 / (fan_in + fan_out)) ** 0.5
    # Stored as (in, out): transpose of PyTorch's (out, in) Linear weight.
    return jax.random.uniform(key, (fan_in, fan_out), jnp.float32, -bound, bound)


def init_neumf_params(key, num_users, num_items, factor_num_mf, layers):
    factor_num_mlp = layers[0] // 2
    keys = jax.random.split(key, 8)
    u_mlp = 0.01 * jax.random.normal(keys[0], (num_users, factor_num_mlp), jnp.float32)
    i_mlp = 0.01 * jax.random.normal(keys[1], (num_items, factor_num_mlp), jnp.float32)
    u_mf = 0.01 * jax.random.normal(keys[2], (num_users, factor_num_mf), jnp.float32)
    i_mf = 0.01 * jax.random.normal(keys[3], (num_items, factor_num_mf), jnp.float32)
    params = {
        # Merged [mlp | mf] tables, stored transposed (d_emb, N) in bf16 so the
        # glue gather directly yields the kernel's (d_emb, batch) layout.
        "user_table_t": jnp.concatenate([u_mlp, u_mf], axis=-1).T.astype(jnp.bfloat16),
        "item_table_t": jnp.concatenate([i_mlp, i_mf], axis=-1).T.astype(jnp.bfloat16),
    }
    fc = []
    for idx, (in_size, out_size) in enumerate(zip(layers[:-1], layers[1:])):
        w = xavier_uniform(keys[4 + idx], in_size, out_size)
        b = jnp.zeros((1, out_size), jnp.float32)
        fc.append((w, b))
    params["fc"] = fc
    params["wa"] = xavier_uniform(keys[7], layers[-1] + factor_num_mf, 1)
    params["ba"] = jnp.zeros((1, 1), jnp.float32)
    return params


# ----------------------------------------------------------------------------
# Wrapper: merged-table gathers (glue) + batch-tiled pallas_call.
# ----------------------------------------------------------------------------
@functools.partial(jax.jit, static_argnames=("tm",))
def neumf_forward(params, user_indices, item_indices, *, tm=2048):
    (w1, b1), (w2, b2), (w3, b3) = params["fc"]
    wa, ba = params["wa"], params["ba"]
    f_mlp = w1.shape[0] // 2
    l1 = w1.shape[1]
    l3 = w3.shape[1]
    d_emb = params["user_table_t"].shape[0]
    f_mf = d_emb - f_mlp

    batch = user_indices.shape[0]
    # Batch tile needs only lane alignment (128).  Cap it so the "parallel"
    # grid keeps >= 2 steps whenever batch > 128 (keeps both v7x TensorCores
    # busy); sweep tm in 1024..4096 for peak throughput on big batches.
    tm_eff = max(128, min(_round_up(tm, 128), _round_up(pl.cdiv(batch, 2), 128)))
    n_tiles = pl.cdiv(batch, tm_eff)
    b_pad = n_tiles * tm_eff
    pad = b_pad - batch

    # Pad indices (index 0 is always valid); padded columns go through the
    # forward and are sliced off at the end.
    u_idx = jnp.pad(user_indices, (0, pad))
    i_idx = jnp.pad(item_indices, (0, pad))

    # Two merged bf16 column-gathers produce the (d_emb, b_pad) layout the
    # kernel consumes directly (no activation transpose pass).
    u_act = params["user_table_t"][:, u_idx]     # (d_emb, b_pad) bf16
    i_act = params["item_table_t"][:, i_idx]     # (d_emb, b_pad) bf16
    # TODO(synk): when the tables fit in VMEM, move this gather in-kernel
    # (indices via scalar prefetch + in-kernel gather/DMA) to kill the HBM
    # round-trip of the gathered rows entirely; keep this XLA path as the
    # fallback for huge tables.

    # Concat-free, slice-free weight prep (layout plumbing stays in glue):
    # layer-1 weight split into user/item halves, zero-padded over the mf
    # feature columns; affine head split into MLP / GMF halves, the GMF half
    # zero-padded over the mlp feature rows.  Order matches torch:
    # cat([user, item]) into layer 1 and cat([mlp_out, mf_vec]) into the head.
    zpad = jnp.zeros((l1, f_mf), jnp.float32)
    w1u_t = jnp.concatenate([w1[:f_mlp].T, zpad], axis=1).astype(jnp.bfloat16)
    w1i_t = jnp.concatenate([w1[f_mlp:].T, zpad], axis=1).astype(jnp.bfloat16)
    w2_t = w2.T.astype(jnp.bfloat16)
    w3_t = w3.T.astype(jnp.bfloat16)
    b1_c, b2_c, b3_c = b1.T, b2.T, b3.T                       # (L, 1) f32
    wah_r = wa[:l3].T                                          # (1, L3) f32
    wam_r = jnp.concatenate(
        [jnp.zeros((1, f_mlp), jnp.float32), wa[l3:].T], axis=1)  # (1, d_emb)

    weights = (w1u_t, w1i_t, b1_c, w2_t, b2_c, w3_t, b3_c, wah_r, wam_r, ba)

    act_spec = pl.BlockSpec((d_emb, tm_eff), lambda b: (0, b))

    def resident_spec(x):
        # Constant index_map: block never changes -> stays VMEM-resident.
        return pl.BlockSpec(x.shape, lambda b: (0, 0))

    flops = (
        2 * b_pad * (w1.size + w2.size + w3.size)   # MLP tower matmuls
        + 2 * b_pad * (l3 + d_emb)                  # affine-head dots
        + b_pad * d_emb                             # GMF product
    )
    bytes_accessed = (
        2 * b_pad * d_emb * 2                                     # bf16 activations
        + b_pad * 4                                               # f32 ratings out
        + (w1u_t.size + w1i_t.size + w2_t.size + w3_t.size) * 2   # bf16 weights
        + (b1.size + b2.size + b3.size + l3 + d_emb + 1) * 4      # f32 biases + head
    )

    rating = pl.pallas_call(
        neumf_kernel,
        out_shape=jax.ShapeDtypeStruct((1, b_pad), jnp.float32),
        grid_spec=pltpu.PrefetchScalarGridSpec(
            num_scalar_prefetch=0,
            grid=(n_tiles,),
            in_specs=[act_spec, act_spec] + [resident_spec(w) for w in weights],
            out_specs=pl.BlockSpec((1, tm_eff), lambda b: (0, b)),
        ),
        compiler_params=pltpu.CompilerParams(
            dimension_semantics=("parallel",),
            vmem_limit_bytes=32 * 1024 * 1024,   # fits all gens, incl. v7x 64 MiB
        ),
        cost_estimate=pl.CostEstimate(
            flops=flops, transcendentals=b_pad, bytes_accessed=bytes_accessed),
    )(u_act, i_act, *weights)

    # torch: rating.squeeze()
    return rating[0, :batch]


# ----------------------------------------------------------------------------
# Pure-JAX (f32) reference for correctness checking.
# ----------------------------------------------------------------------------
def neumf_reference(params, user_indices, item_indices):
    (w1, b1), (w2, b2), (w3, b3) = params["fc"]
    f_mlp = w1.shape[0] // 2
    u = params["user_table_t"].astype(jnp.float32).T[user_indices]
    i = params["item_table_t"].astype(jnp.float32).T[item_indices]
    mlp_vec = jnp.concatenate([u[:, :f_mlp], i[:, :f_mlp]], axis=-1)
    mf_vec = u[:, f_mlp:] * i[:, f_mlp:]
    h = mlp_vec
    for w, b in params["fc"]:
        h = jnp.maximum(h @ w + b, 0.0)
    vec = jnp.concatenate([h, mf_vec], axis=-1)
    logits = vec @ params["wa"] + params["ba"]
    return jnp.squeeze(jax.nn.sigmoid(logits))


if __name__ == "__main__":
    # Config consistent with the module:
    #   args.factor_num = 8, args.layers = [64, 32, 16, 8]  => factor_num_mlp = 32
    num_users, num_items = 32, 64
    factor_num_mf = 8
    layers = [64, 32, 16, 8]
    batch = 600      # NOT a tile multiple -> exercises padding and a 2-step grid
    tm = 2048        # requested tile; auto-capped so the grid keeps >= 2 steps

    key = jax.random.PRNGKey(0)
    pkey, ukey, ikey = jax.random.split(key, 3)

    params = init_neumf_params(pkey, num_users, num_items, factor_num_mf, layers)
    user_indices = jax.random.randint(ukey, (batch,), 0, num_users, dtype=jnp.int32)
    item_indices = jax.random.randint(ikey, (batch,), 0, num_items, dtype=jnp.int32)

    out = neumf_forward(params, user_indices, item_indices, tm=tm)
    jax.block_until_ready(out)

    ref = neumf_reference(params, user_indices, item_indices)
    assert out.shape == (batch,), out.shape
    # bf16 MXU operands vs f32 reference -> loose-but-tight-enough tolerance.
    assert jnp.allclose(out, ref, atol=2e-3, rtol=2e-3), (
        float(jnp.max(jnp.abs(out - ref))))

    print("KERNEL_OK")
</pallas_src>

<mosaic_0001>
module attributes {stable_mosaic.version = 11 : i64} {
  func.func @neumf_kernel(%arg0: i32, %arg1: memref<40x384xbf16, #tpu.memory_space<vmem>>, %arg2: memref<40x384xbf16, #tpu.memory_space<vmem>>, %arg3: memref<32x40xbf16, #tpu.memory_space<vmem>>, %arg4: memref<32x40xbf16, #tpu.memory_space<vmem>>, %arg5: memref<32x1xf32, #tpu.memory_space<vmem>>, %arg6: memref<16x32xbf16, #tpu.memory_space<vmem>>, %arg7: memref<16x1xf32, #tpu.memory_space<vmem>>, %arg8: memref<8x16xbf16, #tpu.memory_space<vmem>>, %arg9: memref<8x1xf32, #tpu.memory_space<vmem>>, %arg10: memref<1x8xf32, #tpu.memory_space<vmem>>, %arg11: memref<1x40xf32, #tpu.memory_space<vmem>>, %arg12: memref<1x1xf32, #tpu.memory_space<vmem>>, %arg13: memref<1x384xf32, #tpu.memory_space<vmem>>) attributes {dimension_semantics = [#tpu.dimension_semantics<parallel>], iteration_bounds = array<i64: 2>, scalar_prefetch = 0 : i64, scratch_operands = 0 : i64, tpu.core_type = #tpu.core_type<tc>, window_params = [{transform_indices = @transform_0, window_bounds = array<i64: 40, 384>}, {transform_indices = @transform_1, window_bounds = array<i64: 40, 384>}, {pipeline_mode = #tpu.pipeline_mode<synchronous>, transform_indices = @transform_2, window_bounds = array<i64: 32, 40>}, {pipeline_mode = #tpu.pipeline_mode<synchronous>, transform_indices = @transform_3, window_bounds = array<i64: 32, 40>}, {pipeline_mode = #tpu.pipeline_mode<synchronous>, transform_indices = @transform_4, window_bounds = array<i64: 32, 1>}, {pipeline_mode = #tpu.pipeline_mode<synchronous>, transform_indices = @transform_5, window_bounds = array<i64: 16, 32>}, {pipeline_mode = #tpu.pipeline_mode<synchronous>, transform_indices = @transform_6, window_bounds = array<i64: 16, 1>}, {pipeline_mode = #tpu.pipeline_mode<synchronous>, transform_indices = @transform_7, window_bounds = array<i64: 8, 16>}, {pipeline_mode = #tpu.pipeline_mode<synchronous>, transform_indices = @transform_8, window_bounds = array<i64: 8, 1>}, {pipeline_mode = #tpu.pipeline_mode<synchronous>, transform_indices = @transform_9, window_bounds = array<i64: 1, 8>}, {pipeline_mode = #tpu.pipeline_mode<synchronous>, transform_indices = @transform_10, window_bounds = array<i64: 1, 40>}, {pipeline_mode = #tpu.pipeline_mode<synchronous>, transform_indices = @transform_11, window_bounds = array<i64: 1, 1>}, {transform_indices = @transform_12, window_bounds = array<i64: 1, 384>}]} {
    %c0 = arith.constant 0 : index
    %c0_0 = arith.constant 0 : index
    %0 = vector.load %arg1[%c0, %c0_0] : memref<40x384xbf16, #tpu.memory_space<vmem>>, vector<40x384xbf16>
    %c0_1 = arith.constant 0 : index
    %c0_2 = arith.constant 0 : index
    %1 = vector.load %arg2[%c0_1, %c0_2] : memref<40x384xbf16, #tpu.memory_space<vmem>>, vector<40x384xbf16>
    %c0_3 = arith.constant 0 : index
    %c0_4 = arith.constant 0 : index
    %2 = vector.load %arg3[%c0_3, %c0_4] : memref<32x40xbf16, #tpu.memory_space<vmem>>, vector<32x40xbf16>
    %cst = arith.constant dense<0.000000e+00> : vector<32x384xf32>
    %3 = tpu.matmul %2, %0, %cst {dimension_numbers = #tpu.dot_dimension_numbers<[1], [0], [0], [1], [0, 0, 1, 1], [], []>} : vector<32x40xbf16>, vector<40x384xbf16>, vector<32x384xf32> -> vector<32x384xf32>
    %c0_5 = arith.constant 0 : index
    %c0_6 = arith.constant 0 : index
    %4 = vector.load %arg4[%c0_5, %c0_6] : memref<32x40xbf16, #tpu.memory_space<vmem>>, vector<32x40xbf16>
    %cst_7 = arith.constant dense<0.000000e+00> : vector<32x384xf32>
    %5 = tpu.matmul %4, %1, %cst_7 {dimension_numbers = #tpu.dot_dimension_numbers<[1], [0], [0], [1], [0, 0, 1, 1], [], []>} : vector<32x40xbf16>, vector<40x384xbf16>, vector<32x384xf32> -> vector<32x384xf32>
    %6 = arith.addf %3, %5 : vector<32x384xf32>
    %c0_8 = arith.constant 0 : index
    %c0_9 = arith.constant 0 : index
    %7 = vector.load %arg5[%c0_8, %c0_9] : memref<32x1xf32, #tpu.memory_space<vmem>>, vector<32x1xf32>
    %8 = vector.broadcast %7 : vector<32x1xf32> to vector<32x384xf32>
    %9 = arith.addf %6, %8 : vector<32x384xf32>
    %cst_10 = arith.constant 0.000000e+00 : f32
    %10 = vector.broadcast %cst_10 : f32 to vector<32x384xf32>
    %11 = arith.maximumf %9, %10 : vector<32x384xf32>
    %c0_11 = arith.constant 0 : index
    %c0_12 = arith.constant 0 : index
    %12 = vector.load %arg6[%c0_11, %c0_12] : memref<16x32xbf16, #tpu.memory_space<vmem>>, vector<16x32xbf16>
    %13 = arith.truncf %11 : vector<32x384xf32> to vector<32x384xbf16>
    %cst_13 = arith.constant dense<0.000000e+00> : vector<16x384xf32>
    %14 = tpu.matmul %12, %13, %cst_13 {dimension_numbers = #tpu.dot_dimension_numbers<[1], [0], [0], [1], [0, 0, 1, 1], [], []>} : vector<16x32xbf16>, vector<32x384xbf16>, vector<16x384xf32> -> vector<16x384xf32>
    %c0_14 = arith.constant 0 : index
    %c0_15 = arith.constant 0 : index
    %15 = vector.load %arg7[%c0_14, %c0_15] : memref<16x1xf32, #tpu.memory_space<vmem>>, vector<16x1xf32>
    %16 = vector.broadcast %15 : vector<16x1xf32> to vector<16x384xf32>
    %17 = arith.addf %14, %16 : vector<16x384xf32>
    %cst_16 = arith.constant 0.000000e+00 : f32
    %18 = vector.broadcast %cst_16 : f32 to vector<16x384xf32>
    %19 = arith.maximumf %17, %18 : vector<16x384xf32>
    %c0_17 = arith.constant 0 : index
    %c0_18 = arith.constant 0 : index
    %20 = vector.load %arg8[%c0_17, %c0_18] : memref<8x16xbf16, #tpu.memory_space<vmem>>, vector<8x16xbf16>
    %21 = arith.truncf %19 : vector<16x384xf32> to vector<16x384xbf16>
    %cst_19 = arith.constant dense<0.000000e+00> : vector<8x384xf32>
    %22 = tpu.matmul %20, %21, %cst_19 {dimension_numbers = #tpu.dot_dimension_numbers<[1], [0], [0], [1], [0, 0, 1, 1], [], []>} : vector<8x16xbf16>, vector<16x384xbf16>, vector<8x384xf32> -> vector<8x384xf32>
    %c0_20 = arith.constant 0 : index
    %c0_21 = arith.constant 0 : index
    %23 = vector.load %arg9[%c0_20, %c0_21] : memref<8x1xf32, #tpu.memory_space<vmem>>, vector<8x1xf32>
    %24 = vector.broadcast %23 : vector<8x1xf32> to vector<8x384xf32>
    %25 = arith.addf %22, %24 : vector<8x384xf32>
    %cst_22 = arith.constant 0.000000e+00 : f32
    %26 = vector.broadcast %cst_22 : f32 to vector<8x384xf32>
    %27 = arith.maximumf %25, %26 : vector<8x384xf32>
    %28 = arith.extf %0 : vector<40x384xbf16> to vector<40x384xf32>
    %29 = arith.extf %1 : vector<40x384xbf16> to vector<40x384xf32>
    %30 = arith.mulf %28, %29 : vector<40x384xf32>
    %c0_23 = arith.constant 0 : index
    %c0_24 = arith.constant 0 : index
    %31 = vector.load %arg10[%c0_23, %c0_24] : memref<1x8xf32, #tpu.memory_space<vmem>>, vector<1x8xf32>
    %cst_25 = arith.constant dense<0.000000e+00> : vector<1x384xf32>
    %32 = tpu.matmul %31, %27, %cst_25 {dimension_numbers = #tpu.dot_dimension_numbers<[1], [0], [0], [1], [0, 0, 1, 1], [], []>} : vector<1x8xf32>, vector<8x384xf32>, vector<1x384xf32> -> vector<1x384xf32>
    %c0_26 = arith.constant 0 : index
    %c0_27 = arith.constant 0 : index
    %33 = vector.load %arg11[%c0_26, %c0_27] : memref<1x40xf32, #tpu.memory_space<vmem>>, vector<1x40xf32>
    %cst_28 = arith.constant dense<0.000000e+00> : vector<1x384xf32>
    %34 = tpu.matmul %33, %30, %cst_28 {dimension_numbers = #tpu.dot_dimension_numbers<[1], [0], [0], [1], [0, 0, 1, 1], [], []>} : vector<1x40xf32>, vector<40x384xf32>, vector<1x384xf32> -> vector<1x384xf32>
    %35 = arith.addf %32, %34 : vector<1x384xf32>
    %c0_29 = arith.constant 0 : index
    %c0_30 = arith.constant 0 : index
    %36 = vector.load %arg12[%c0_29, %c0_30] : memref<1x1xf32, #tpu.memory_space<vmem>>, vector<1x1xf32>
    %37 = vector.broadcast %36 : vector<1x1xf32> to vector<1x384xf32>
    %38 = arith.addf %35, %37 : vector<1x384xf32>
    %39 = arith.negf %38 : vector<1x384xf32>
    %40 = math.exp %39 : vector<1x384xf32>
    %cst_31 = arith.constant 1.000000e+00 : f32
    %41 = vector.broadcast %cst_31 : f32 to vector<1x384xf32>
    %42 = arith.addf %41, %40 : vector<1x384xf32>
    %43 = arith.divf %41, %42 : vector<1x384xf32>
    %c0_32 = arith.constant 0 : index
    %c0_33 = arith.constant 0 : index
    %44 = vector.load %arg13[%c0_32, %c0_33] : memref<1x384xf32, #tpu.memory_space<vmem>>, vector<1x384xf32>
    tpu.vector_store %arg13[%c0_32, %c0_33], %43 {strides = array<i32>} : memref<1x384xf32, #tpu.memory_space<vmem>>, vector<1x384xf32>,
    return
  }
  func.func @transform_0(%arg0: i32) -> (i32, i32) {
    %c0_i32 = arith.constant 0 : i32
    %c0_i32_0 = arith.constant 0 : i32
    return %c0_i32, %arg0 : i32, i32
  }
  func.func @transform_1(%arg0: i32) -> (i32, i32) {
    %c0_i32 = arith.constant 0 : i32
    %c0_i32_0 = arith.constant 0 : i32
    return %c0_i32, %arg0 : i32, i32
  }
  func.func @transform_2(%arg0: i32) -> (i32, i32) {
    %c0_i32 = arith.constant 0 : i32
    %c0_i32_0 = arith.constant 0 : i32
    %c0_i32_1 = arith.constant 0 : i32
    return %c0_i32, %c0_i32_0 : i32, i32
  }
  func.func @transform_3(%arg0: i32) -> (i32, i32) {
    %c0_i32 = arith.constant 0 : i32
    %c0_i32_0 = arith.constant 0 : i32
    %c0_i32_1 = arith.constant 0 : i32
    return %c0_i32, %c0_i32_0 : i32, i32
  }
  func.func @transform_4(%arg0: i32) -> (i32, i32) {
    %c0_i32 = arith.constant 0 : i32
    %c0_i32_0 = arith.constant 0 : i32
    %c0_i32_1 = arith.constant 0 : i32
    return %c0_i32, %c0_i32_0 : i32, i32
  }
  func.func @transform_5(%arg0: i32) -> (i32, i32) {
    %c0_i32 = arith.constant 0 : i32
    %c0_i32_0 = arith.constant 0 : i32
    %c0_i32_1 = arith.constant 0 : i32
    return %c0_i32, %c0_i32_0 : i32, i32
  }
  func.func @transform_6(%arg0: i32) -> (i32, i32) {
    %c0_i32 = arith.constant 0 : i32
    %c0_i32_0 = arith.constant 0 : i32
    %c0_i32_1 = arith.constant 0 : i32
    return %c0_i32, %c0_i32_0 : i32, i32
  }
  func.func @transform_7(%arg0: i32) -> (i32, i32) {
    %c0_i32 = arith.constant 0 : i32
    %c0_i32_0 = arith.constant 0 : i32
    %c0_i32_1 = arith.constant 0 : i32
    return %c0_i32, %c0_i32_0 : i32, i32
  }
  func.func @transform_8(%arg0: i32) -> (i32, i32) {
    %c0_i32 = arith.constant 0 : i32
    %c0_i32_0 = arith.constant 0 : i32
    %c0_i32_1 = arith.constant 0 : i32
    return %c0_i32, %c0_i32_0 : i32, i32
  }
  func.func @transform_9(%arg0: i32) -> (i32, i32) {
    %c0_i32 = arith.constant 0 : i32
    %c0_i32_0 = arith.constant 0 : i32
    %c0_i32_1 = arith.constant 0 : i32
    return %c0_i32, %c0_i32_0 : i32, i32
  }
  func.func @transform_10(%arg0: i32) -> (i32, i32) {
    %c0_i32 = arith.constant 0 : i32
    %c0_i32_0 = arith.constant 0 : i32
    %c0_i32_1 = arith.constant 0 : i32
    return %c0_i32, %c0_i32_0 : i32, i32
  }
  func.func @transform_11(%arg0: i32) -> (i32, i32) {
    %c0_i32 = arith.constant 0 : i32
    %c0_i32_0 = arith.constant 0 : i32
    %c0_i32_1 = arith.constant 0 : i32
    return %c0_i32, %c0_i32_0 : i32, i32
  }
  func.func @transform_12(%arg0: i32) -> (i32, i32) {
    %c0_i32 = arith.constant 0 : i32
    %c0_i32_0 = arith.constant 0 : i32
    return %c0_i32, %arg0 : i32, i32
  }
}

</mosaic_0001>

<llo_original>
// kernel: neumf_forward.1
$region0: #{neumf_forward.1}
  #allocation0 [shape = 'u32[]', space=smem, size = 0x4, offset = 0x4, fixed_abs, tag = 'smem constant byte address 0x4 - core index']
  #allocation1 [shape = 'u32[144,128]{1,0:T(1,128)}', space=vmem, size = 0x12000, scoped, tag = 'internal scratch']
  #allocation2 [shape = 'f32[1,1]{1,0:T(1,128)S(1)}', space=vmem, size = 0x200, scoped, tag = 'scoped memory for neumf_forward.1']
  %s0 = inlined_call_operand.vmem [shape: bf16[40,768], index: 0, kind: input, shape index: {}]
  %s1 = inlined_call_operand.vmem [shape: bf16[40,768], index: 1, kind: input, shape index: {}]
  %s2 = inlined_call_operand.vmem [shape: bf16[32,40], index: 2, kind: input, shape index: {}]
  %s3 = inlined_call_operand.vmem [shape: bf16[32,40], index: 3, kind: input, shape index: {}]
  %s4 = inlined_call_operand.vmem [shape: f32[32,1], index: 4, kind: input, shape index: {}]
  %s5 = inlined_call_operand.vmem [shape: bf16[16,32], index: 5, kind: input, shape index: {}]
  %s6 = inlined_call_operand.vmem [shape: f32[16,1], index: 6, kind: input, shape index: {}]
  %s7 = inlined_call_operand.vmem [shape: bf16[8,16], index: 7, kind: input, shape index: {}]
  %s8 = inlined_call_operand.vmem [shape: f32[8,1], index: 8, kind: input, shape index: {}]
  %s9 = inlined_call_operand.vmem [shape: f32[1,8], index: 9, kind: input, shape index: {}]
  %s10 = inlined_call_operand.vmem [shape: f32[1,40], index: 10, kind: input, shape index: {}]
  %s11 = inlined_call_operand.<no memory space> [shape: f32[1,1], index: 11, kind: input, shape index: {}]
  %s12 = inlined_call_operand.vmem [shape: f32[1,768], index: 12, kind: output, shape index: {}]
  %s13 = sld [smem:[#allocation0]]
  $region133: #{neumf_forward.1} parent=0
    _
  %s15 = ssub.s32 1, %s13
  %s16 = scalar_select 0, %s15, %s13
  %v17 = vstv %s11
  %18 = vst [vmem:[#allocation2] sm:$0x1] %v17
  $region1: #{neumf_forward.1} parent=0
    #allocation3 [shape = 'u8[61440]{0}', space=vmem, size = 0xf000, scoped, tag = 'input window, operand 0']
    #allocation4 [shape = 'u8[61440]{0}', space=vmem, size = 0xf000, scoped, tag = 'input window, operand 1']
    loop: start=0, step=1, limit=4
    $region2: #{neumf_forward.1} parent=1 // loop_pre_header
      _
    $region3: #{neumf_forward.1} parent=1 // loop_header
      %s20 = sphi 0, %s24
      %p21 = scmp.ge.s32.totalorder %s20, 4
      %s30 = sphi 0, %s32
      %s33 = sphi 0, %s30
      %s34 = sphi 0, %s33
      %s50 = sphi 0, %s34
      %s56 = sphi 0, %s58
      %s59 = sphi 0, %s56
      %s60 = sphi 0, %s59
      %s76 = sphi 0, %s60
      %s80 = sphi 0, %s80
      %s82 = sphi 0, %s80
      %s83 = sphi 0, %s82
      %s97 = sphi 0, %s83
      %s101 = sphi 0, %s101
      %s103 = sphi 0, %s101
      %s104 = sphi 0, %s103
      %s118 = sphi 0, %s104
      %s122 = sphi 0, %s122
      %s124 = sphi 0, %s122
      %s125 = sphi 0, %s124
      %s139 = sphi 0, %s125
      %s143 = sphi 0, %s143
      %s145 = sphi 0, %s143
      %s146 = sphi 0, %s145
      %s160 = sphi 0, %s146
      %s164 = sphi 0, %s164
      %s166 = sphi 0, %s164
      %s167 = sphi 0, %s166
      %s181 = sphi 0, %s167
      %s185 = sphi 0, %s185
      %s187 = sphi 0, %s185
      %s188 = sphi 0, %s187
      %s202 = sphi 0, %s188
      %s206 = sphi 0, %s206
      %s208 = sphi 0, %s206
      %s209 = sphi 0, %s208
      %s223 = sphi 0, %s209
      %s227 = sphi 0, %s227
      %s229 = sphi 0, %s227
      %s230 = sphi 0, %s229
      %s244 = sphi 0, %s230
      %s248 = sphi 0, %s248
      %s250 = sphi 0, %s248
      %s251 = sphi 0, %s250
      %s265 = sphi 0, %s251
      %s269 = sphi 0, %s269
      %s271 = sphi 0, %s269
      %s272 = sphi 0, %s271
      %s286 = sphi 0, %s272
      %s292 = sphi 0, %s294
      %s295 = sphi 0, %s292
      %s296 = sphi 0, %s295
      %s312 = sphi 0, %s296
    $region4: #{neumf_forward.1} parent=1 // loop_header_branch
      %23 = sbr.rel (%p21) target = $region8
    $region5: #{neumf_forward.1} parent=1 // loop_body
      %s25 = ssub.s32 %s20, 1
      %s26 = ssub.s32 %s20, 2
      %s27 = sadd.s32 %s20, 1
      %s28 = ssub.s32 %s20, %s27
      %p29 = scmp.eq.s32.totalorder %s28, 0
      %s31 = sadd.s32 %s30, 1
      %s32 = scalar_select %p29, %s30, %s31
      %p35 = pneg %p29
      %p36 = scmp.eq.s32.totalorder %s20, 1
      %p37 = por %p35, %p36
      %p38 = scmp.ne.s32.totalorder %s30, %s33
      %p39 = scmp.eq.s32.totalorder %s20, 0
      %p40 = por %p38, %p39
      %p41 = scmp.ne.s32.totalorder %s30, %s33
      %p42 = scmp.eq.s32.totalorder %s25, 1
      %p43 = por %p41, %p42
      %p44 = scmp.ne.s32.totalorder %s33, %s34
      %p45 = scmp.eq.s32.totalorder %s25, 0
      %p46 = por %p44, %p45
      %p47 = scmp.ne.s32.totalorder %s33, %s34
      %p48 = scmp.eq.s32.totalorder %s26, 1
      %p49 = por %p47, %p48
      %p51 = scmp.ne.s32.totalorder %s34, %s50
      %p52 = scmp.eq.s32.totalorder %s26, 0
      %p53 = por %p51, %p52
      %s54 = ssub.s32 %s20, %s27
      %p55 = scmp.eq.s32.totalorder %s54, 0
      %s57 = sadd.s32 %s56, 1
      %s58 = scalar_select %p55, %s56, %s57
      %p61 = pneg %p55
      %p62 = scmp.eq.s32.totalorder %s20, 1
      %p63 = por %p61, %p62
      %p64 = scmp.ne.s32.totalorder %s56, %s59
      %p65 = scmp.eq.s32.totalorder %s20, 0
      %p66 = por %p64, %p65
      %p67 = scmp.ne.s32.totalorder %s56, %s59
      %p68 = scmp.eq.s32.totalorder %s25, 1
      %p69 = por %p67, %p68
      %p70 = scmp.ne.s32.totalorder %s59, %s60
      %p71 = scmp.eq.s32.totalorder %s25, 0
      %p72 = por %p70, %p71
      %p73 = scmp.ne.s32.totalorder %s59, %s60
      %p74 = scmp.eq.s32.totalorder %s26, 1
      %p75 = por %p73, %p74
      %p77 = scmp.ne.s32.totalorder %s60, %s76
      %p78 = scmp.eq.s32.totalorder %s26, 0
      %p79 = por %p77, %p78
      %s81 = sadd.s32 %s80, 1
      %p84 = scmp.eq.s32.totalorder %s20, 1
      %p85 = scmp.ne.s32.totalorder %s80, %s82
      %p86 = scmp.eq.s32.totalorder %s20, 0
      %p87 = por %p85, %p86
      %p88 = scmp.ne.s32.totalorder %s80, %s82
      %p89 = scmp.eq.s32.totalorder %s25, 1
      %p90 = por %p88, %p89
      %p91 = scmp.ne.s32.totalorder %s82, %s83
      %p92 = scmp.eq.s32.totalorder %s25, 0
      %p93 = por %p91, %p92
      %p94 = scmp.ne.s32.totalorder %s82, %s83
      %p95 = scmp.eq.s32.totalorder %s26, 1
      %p96 = por %p94, %p95
      %p98 = scmp.ne.s32.totalorder %s83, %s97
      %p99 = scmp.eq.s32.totalorder %s26, 0
      %p100 = por %p98, %p99
      %s102 = sadd.s32 %s101, 1
      %p105 = scmp.eq.s32.totalorder %s20, 1
      %p106 = scmp.ne.s32.totalorder %s101, %s103
      %p107 = scmp.eq.s32.totalorder %s20, 0
      %p108 = por %p106, %p107
      %p109 = scmp.ne.s32.totalorder %s101, %s103
      %p110 = scmp.eq.s32.totalorder %s25, 1
      %p111 = por %p109, %p110
      %p112 = scmp.ne.s32.totalorder %s103, %s104
      %p113 = scmp.eq.s32.totalorder %s25, 0
      %p114 = por %p112, %p113
      %p115 = scmp.ne.s32.totalorder %s103, %s104
      %p116 = scmp.eq.s32.totalorder %s26, 1
      %p117 = por %p115, %p116
      %p119 = scmp.ne.s32.totalorder %s104, %s118
      %p120 = scmp.eq.s32.totalorder %s26, 0
      %p121 = por %p119, %p120
      %s123 = sadd.s32 %s122, 1
      %p126 = scmp.eq.s32.totalorder %s20, 1
      %p127 = scmp.ne.s32.totalorder %s122, %s124
      %p128 = scmp.eq.s32.totalorder %s20, 0
      %p129 = por %p127, %p128
      %p130 = scmp.ne.s32.totalorder %s122, %s124
      %p131 = scmp.eq.s32.totalorder %s25, 1
      %p132 = por %p130, %p131
      %p133 = scmp.ne.s32.totalorder %s124, %s125
      %p134 = scmp.eq.s32.totalorder %s25, 0
      %p135 = por %p133, %p134
      %p136 = scmp.ne.s32.totalorder %s124, %s125
      %p137 = scmp.eq.s32.totalorder %s26, 1
      %p138 = por %p136, %p137
      %p140 = scmp.ne.s32.totalorder %s125, %s139
      %p141 = scmp.eq.s32.totalorder %s26, 0
      %p142 = por %p140, %p141
      %s144 = sadd.s32 %s143, 1
      %p147 = scmp.eq.s32.totalorder %s20, 1
      %p148 = scmp.ne.s32.totalorder %s143, %s145
      %p149 = scmp.eq.s32.totalorder %s20, 0
      %p150 = por %p148, %p149
      %p151 = scmp.ne.s32.totalorder %s143, %s145
      %p152 = scmp.eq.s32.totalorder %s25, 1
      %p153 = por %p151, %p152
      %p154 = scmp.ne.s32.totalorder %s145, %s146
      %p155 = scmp.eq.s32.totalorder %s25, 0
      %p156 = por %p154, %p155
      %p157 = scmp.ne.s32.totalorder %s145, %s146
      %p158 = scmp.eq.s32.totalorder %s26, 1
      %p159 = por %p157, %p158
      %p161 = scmp.ne.s32.totalorder %s146, %s160
      %p162 = scmp.eq.s32.totalorder %s26, 0
      %p163 = por %p161, %p162
      %s165 = sadd.s32 %s164, 1
      %p168 = scmp.eq.s32.totalorder %s20, 1
      %p169 = scmp.ne.s32.totalorder %s164, %s166
      %p170 = scmp.eq.s32.totalorder %s20, 0
      %p171 = por %p169, %p170
      %p172 = scmp.ne.s32.totalorder %s164, %s166
      %p173 = scmp.eq.s32.totalorder %s25, 1
      %p174 = por %p172, %p173
      %p175 = scmp.ne.s32.totalorder %s166, %s167
      %p176 = scmp.eq.s32.totalorder %s25, 0
      %p177 = por %p175, %p176
      %p178 = scmp.ne.s32.totalorder %s166, %s167
      %p179 = scmp.eq.s32.totalorder %s26, 1
      %p180 = por %p178, %p179
      %p182 = scmp.ne.s32.totalorder %s167, %s181
      %p183 = scmp.eq.s32.totalorder %s26, 0
      %p184 = por %p182, %p183
      %s186 = sadd.s32 %s185, 1
      %p189 = scmp.eq.s32.totalorder %s20, 1
      %p190 = scmp.ne.s32.totalorder %s185, %s187
      %p191 = scmp.eq.s32.totalorder %s20, 0
      %p192 = por %p190, %p191
      %p193 = scmp.ne.s32.totalorder %s185, %s187
      %p194 = scmp.eq.s32.totalorder %s25, 1
      %p195 = por %p193, %p194
      %p196 = scmp.ne.s32.totalorder %s187, %s188
      %p197 = scmp.eq.s32.totalorder %s25, 0
      %p198 = por %p196, %p197
      %p199 = scmp.ne.s32.totalorder %s187, %s188
      %p200 = scmp.eq.s32.totalorder %s26, 1
      %p201 = por %p199, %p200
      %p203 = scmp.ne.s32.totalorder %s188, %s202
      %p204 = scmp.eq.s32.totalorder %s26, 0
      %p205 = por %p203, %p204
      %s207 = sadd.s32 %s206, 1
      %p210 = scmp.eq.s32.totalorder %s20, 1
      %p211 = scmp.ne.s32.totalorder %s206, %s208
      %p212 = scmp.eq.s32.totalorder %s20, 0
      %p213 = por %p211, %p212
      %p214 = scmp.ne.s32.totalorder %s206, %s208
      %p215 = scmp.eq.s32.totalorder %s25, 1
      %p216 = por %p214, %p215
      %p217 = scmp.ne.s32.totalorder %s208, %s209
      %p218 = scmp.eq.s32.totalorder %s25, 0
      %p219 = por %p217, %p218
      %p220 = scmp.ne.s32.totalorder %s208, %s209
      %p221 = scmp.eq.s32.totalorder %s26, 1
      %p222 = por %p220, %p221
      %p224 = scmp.ne.s32.totalorder %s209, %s223
      %p225 = scmp.eq.s32.totalorder %s26, 0
      %p226 = por %p224, %p225
      %s228 = sadd.s32 %s227, 1
      %p231 = scmp.eq.s32.totalorder %s20, 1
      %p232 = scmp.ne.s32.totalorder %s227, %s229
      %p233 = scmp.eq.s32.totalorder %s20, 0
      %p234 = por %p232, %p233
      %p235 = scmp.ne.s32.totalorder %s227, %s229
      %p236 = scmp.eq.s32.totalorder %s25, 1
      %p237 = por %p235, %p236
      %p238 = scmp.ne.s32.totalorder %s229, %s230
      %p239 = scmp.eq.s32.totalorder %s25, 0
      %p240 = por %p238, %p239
      %p241 = scmp.ne.s32.totalorder %s229, %s230
      %p242 = scmp.eq.s32.totalorder %s26, 1
      %p243 = por %p241, %p242
      %p245 = scmp.ne.s32.totalorder %s230, %s244
      %p246 = scmp.eq.s32.totalorder %s26, 0
      %p247 = por %p245, %p246
      %s249 = sadd.s32 %s248, 1
      %p252 = scmp.eq.s32.totalorder %s20, 1
      %p253 = scmp.ne.s32.totalorder %s248, %s250
      %p254 = scmp.eq.s32.totalorder %s20, 0
      %p255 = por %p253, %p254
      %p256 = scmp.ne.s32.totalorder %s248, %s250
      %p257 = scmp.eq.s32.totalorder %s25, 1
      %p258 = por %p256, %p257
      %p259 = scmp.ne.s32.totalorder %s250, %s251
      %p260 = scmp.eq.s32.totalorder %s25, 0
      %p261 = por %p259, %p260
      %p262 = scmp.ne.s32.totalorder %s250, %s251
      %p263 = scmp.eq.s32.totalorder %s26, 1
      %p264 = por %p262, %p263
      %p266 = scmp.ne.s32.totalorder %s251, %s265
      %p267 = scmp.eq.s32.totalorder %s26, 0
      %p268 = por %p266, %p267
      %s270 = sadd.s32 %s269, 1
      %p273 = scmp.eq.s32.totalorder %s20, 1
      %p274 = scmp.ne.s32.totalorder %s269, %s271
      %p275 = scmp.eq.s32.totalorder %s20, 0
      %p276 = por %p274, %p275
      %p277 = scmp.ne.s32.totalorder %s269, %s271
      %p278 = scmp.eq.s32.totalorder %s25, 1
      %p279 = por %p277, %p278
      %p280 = scmp.ne.s32.totalorder %s271, %s272
      %p281 = scmp.eq.s32.totalorder %s25, 0
      %p282 = por %p280, %p281
      %p283 = scmp.ne.s32.totalorder %s271, %s272
      %p284 = scmp.eq.s32.totalorder %s26, 1
      %p285 = por %p283, %p284
      %p287 = scmp.ne.s32.totalorder %s272, %s286
      %p288 = scmp.eq.s32.totalorder %s26, 0
      %p289 = por %p287, %p288
      %s290 = ssub.s32 %s20, %s27
      %p291 = scmp.eq.s32.totalorder %s290, 0
      %s293 = sadd.s32 %s292, 1
      %s294 = scalar_select %p291, %s292, %s293
      %p297 = pneg %p291
      %p298 = scmp.eq.s32.totalorder %s20, 1
      %p299 = por %p297, %p298
      %p300 = scmp.ne.s32.totalorder %s292, %s295
      %p301 = scmp.eq.s32.totalorder %s20, 0
      %p302 = por %p300, %p301
      %p303 = scmp.ne.s32.totalorder %s292, %s295
      %p304 = scmp.eq.s32.totalorder %s25, 1
      %p305 = por %p303, %p304
      %p306 = scmp.ne.s32.totalorder %s295, %s296
      %p307 = scmp.eq.s32.totalorder %s25, 0
      %p308 = por %p306, %p307
      %p309 = scmp.ne.s32.totalorder %s295, %s296
      %p310 = scmp.eq.s32.totalorder %s26, 1
      %p311 = por %p309, %p310
      %p313 = scmp.ne.s32.totalorder %s296, %s312
      %p314 = scmp.eq.s32.totalorder %s26, 0
      %p315 = por %p313, %p314
      %p316 = scmp.le.s32.totalorder 1, %s20
      %p317 = scmp.lt.s32.totalorder %s20, 3
      %p318 = pnand %p316, %p317
      %p319 = pneg %p318
      // Predicated region
      $region9: #{neumf_forward.1} parent=5 // pred_check
        _
      $region10: #{neumf_forward.1} parent=5 // pred_check_branch
        %321 = sbr.rel (%p318) target = $region12
      $region11: #{neumf_forward.1} parent=5 // pred_region
        %s322 = ssub.s32 %s20, 1
        // Predicated region
        $region13: #{neumf_forward.1} parent=11 // pred_check
          %p323 = pneg %p93
        $region14: #{neumf_forward.1} parent=11 // pred_check_branch
          %325 = sbr.rel (%p323) target = $region16
        $region15: #{neumf_forward.1} parent=11 // pred_region
          _
        $region16: #{neumf_forward.1} parent=11 // pred_fallthru
          _
        // Predicated region
        $region17: #{neumf_forward.1} parent=11 // pred_check
          %p326 = pneg %p114
        $region18: #{neumf_forward.1} parent=11 // pred_check_branch
          %328 = sbr.rel (%p326) target = $region20
        $region19: #{neumf_forward.1} parent=11 // pred_region
          _
        $region20: #{neumf_forward.1} parent=11 // pred_fallthru
          _
        // Predicated region
        $region21: #{neumf_forward.1} parent=11 // pred_check
          %p329 = pneg %p135
        $region22: #{neumf_forward.1} parent=11 // pred_check_branch
          %331 = sbr.rel (%p329) target = $region24
        $region23: #{neumf_forward.1} parent=11 // pred_region
          _
        $region24: #{neumf_forward.1} parent=11 // pred_fallthru
          _
        // Predicated region
        $region25: #{neumf_forward.1} parent=11 // pred_check
          %p332 = pneg %p156
        $region26: #{neumf_forward.1} parent=11 // pred_check_branch
          %334 = sbr.rel (%p332) target = $region28
        $region27: #{neumf_forward.1} parent=11 // pred_region
          _
        $region28: #{neumf_forward.1} parent=11 // pred_fallthru
          _
        // Predicated region
        $region29: #{neumf_forward.1} parent=11 // pred_check
          %p335 = pneg %p177
        $region30: #{neumf_forward.1} parent=11 // pred_check_branch
          %337 = sbr.rel (%p335) target = $region32
        $region31: #{neumf_forward.1} parent=11 // pred_region
          _
        $region32: #{neumf_forward.1} parent=11 // pred_fallthru
          _
        // Predicated region
        $region33: #{neumf_forward.1} parent=11 // pred_check
          %p338 = pneg %p198
        $region34: #{neumf_forward.1} parent=11 // pred_check_branch
          %340 = sbr.rel (%p338) target = $region36
        $region35: #{neumf_forward.1} parent=11 // pred_region
          _
        $region36: #{neumf_forward.1} parent=11 // pred_fallthru
          _
        // Predicated region
        $region37: #{neumf_forward.1} parent=11 // pred_check
          %p341 = pneg %p219
        $region38: #{neumf_forward.1} parent=11 // pred_check_branch
          %343 = sbr.rel (%p341) target = $region40
        $region39: #{neumf_forward.1} parent=11 // pred_region
          _
        $region40: #{neumf_forward.1} parent=11 // pred_fallthru
          _
        // Predicated region
        $region41: #{neumf_forward.1} parent=11 // pred_check
          %p344 = pneg %p240
        $region42: #{neumf_forward.1} parent=11 // pred_check_branch
          %346 = sbr.rel (%p344) target = $region44
        $region43: #{neumf_forward.1} parent=11 // pred_region
          _
        $region44: #{neumf_forward.1} parent=11 // pred_fallthru
          _
        // Predicated region
        $region45: #{neumf_forward.1} parent=11 // pred_check
          %p347 = pneg %p261
        $region46: #{neumf_forward.1} parent=11 // pred_check_branch
          %349 = sbr.rel (%p347) target = $region48
        $region47: #{neumf_forward.1} parent=11 // pred_region
          _
        $region48: #{neumf_forward.1} parent=11 // pred_fallthru
          _
        // Predicated region
        $region49: #{neumf_forward.1} parent=11 // pred_check
          %p350 = pneg %p282
        $region50: #{neumf_forward.1} parent=11 // pred_check_branch
          %352 = sbr.rel (%p350) target = $region52
        $region51: #{neumf_forward.1} parent=11 // pred_region
          _
        $region52: #{neumf_forward.1} parent=11 // pred_fallthru
          _
      $region12: #{neumf_forward.1} parent=5 // pred_fallthru
        _
      %p353 = scmp.lt.s32.totalorder %s20, 2
      // Predicated region
      $region53: #{neumf_forward.1} parent=5 // pred_check
        %p354 = pneg %p353
      $region54: #{neumf_forward.1} parent=5 // pred_check_branch
        %356 = sbr.rel (%p354) target = $region56
      $region55: #{neumf_forward.1} parent=5 // pred_region
        // Predicated region
        $region57: #{neumf_forward.1} parent=55 // pred_check
          %p357 = pneg %p40
        $region58: #{neumf_forward.1} parent=55 // pred_check_branch
          %359 = sbr.rel (%p357) target = $region60
        $region59: #{neumf_forward.1} parent=55 // pred_region
          %s360 = sand.u32 %s30, 1
          %s361 = sand.u32 %s30, 1
          %s362 = smul.addr %s361, 60
          %s363 = scalar_lea.vmem [#allocation3], %s362
          %s364 = smul.u32 3, %s20
          %s365 = smul.addr %s364, 4
          %s366 = scalar_lea.vmem %s0, %s365
          // Predicated region
          $region61: #{neumf_forward.1} parent=59 // pred_check
            _
          $region62: #{neumf_forward.1} parent=59 // pred_check_branch
            %368 = sbr.rel (0) target = $region64
          $region63: #{neumf_forward.1} parent=59 // pred_region
            // Predicated region
            $region65: #{neumf_forward.1} parent=63 // pred_check
              _
            $region66: #{neumf_forward.1} parent=63 // pred_check_branch
              %370 = sbr.rel (0) target = $region68
            $region67: #{neumf_forward.1} parent=63 // pred_region
              %s371 = scalar_lea.vmem %s366, 8
              %s372 = scalar_lea.vmem %s363, 8 [#allocation3]
              loop: start=0, step=1, limit=1
              $region69: #{neumf_forward.1} parent=67 // loop_pre_header
                _
              $region70: #{neumf_forward.1} parent=67 // loop_header
                %s374 = sphi 0, %s378
                %p375 = scmp.ge.s32.totalorder %s374, 1
                %s379 = sphi %s366, %s366
                %s380 = sphi %s363, %s363
              $region71: #{neumf_forward.1} parent=67 // loop_header_branch
                %377 = sbr.rel (%p375) target = $region75
              $region72: #{neumf_forward.1} parent=67 // loop_body
                %v381 = vld [vmem:[%s379] sm:$0xff]
                %382 = vst [vmem:[%s380] sm:$0xff] %v381
                %v383 = vld [vmem:[%s379 + $0x18] sm:$0xff]
                %384 = vst [vmem:[%s380 + $0xc] sm:$0xff] %v383
                %v385 = vld [vmem:[%s379 + $0x30] sm:$0xff]
                %386 = vst [vmem:[%s380 + $0x18] sm:$0xff] %v385
                %v387 = vld [vmem:[%s379 + $0x48] sm:$0xff]
                %388 = vst [vmem:[%s380 + $0x24] sm:$0xff] %v387
                %v389 = vld [vmem:[%s379 + $0x60] sm:$0xff]
                %390 = vst [vmem:[%s380 + $0x30] sm:$0xff] %v389
              $region73: #{neumf_forward.1} parent=67 // loop_footer
                %s378 = sadd.s32 1, %s374
              $region74: #{neumf_forward.1} parent=67 // loop_footer_branch
                %373 = sbr.rel target = $region70
              $region75: #{neumf_forward.1} parent=67 // loop_exit
                _
              %s392 = ssub.s32 16, 1
              loop: start=0, step=1, limit=1
              $region76: #{neumf_forward.1} parent=67 // loop_pre_header
                _
              $region77: #{neumf_forward.1} parent=67 // loop_header
                %s394 = sphi 0, %s398
                %p395 = scmp.ge.s32.totalorder %s394, 1
                %s399 = sphi %s371, %s371
                %s400 = sphi %s372, %s372
              $region78: #{neumf_forward.1} parent=67 // loop_header_branch
                %397 = sbr.rel (%p395) target = $region82
              $region79: #{neumf_forward.1} parent=67 // loop_body
                %v401 = vld [vmem:[%s399] sm:%s392]
                %402 = vst [vmem:[%s400] sm:%s392] %v401
                %v403 = vld [vmem:[%s399 + $0x18] sm:%s392]
                %404 = vst [vmem:[%s400 + $0xc] sm:%s392] %v403
                %v405 = vld [vmem:[%s399 + $0x30] sm:%s392]
                %406 = vst [vmem:[%s400 + $0x18] sm:%s392] %v405
                %v407 = vld [vmem:[%s399 + $0x48] sm:%s392]
                %408 = vst [vmem:[%s400 + $0x24] sm:%s392] %v407
                %v409 = vld [vmem:[%s399 + $0x60] sm:%s392]
                %410 = vst [vmem:[%s400 + $0x30] sm:%s392] %v409
              $region80: #{neumf_forward.1} parent=67 // loop_footer
                %s398 = sadd.s32 1, %s394
              $region81: #{neumf_forward.1} parent=67 // loop_footer_branch
                %393 = sbr.rel target = $region77
              $region82: #{neumf_forward.1} parent=67 // loop_exit
                _
            $region68: #{neumf_forward.1} parent=63 // pred_fallthru
              _
          $region64: #{neumf_forward.1} parent=59 // pred_fallthru
            _
          %411 = vnop
        $region60: #{neumf_forward.1} parent=55 // pred_fallthru
          _
        // Predicated region
        $region83: #{neumf_forward.1} parent=55 // pred_check
          %p412 = pneg %p66
        $region84: #{neumf_forward.1} parent=55 // pred_check_branch
          %414 = sbr.rel (%p412) target = $region86
        $region85: #{neumf_forward.1} parent=55 // pred_region
          %s415 = sand.u32 %s56, 1
          %s416 = sand.u32 %s56, 1
          %s417 = smul.addr %s416, 60
          %s418 = scalar_lea.vmem [#allocation4], %s417
          %s419 = smul.u32 3, %s20
          %s420 = smul.addr %s419, 4
          %s421 = scalar_lea.vmem %s1, %s420
          // Predicated region
          $region87: #{neumf_forward.1} parent=85 // pred_check
            _
          $region88: #{neumf_forward.1} parent=85 // pred_check_branch
            %423 = sbr.rel (0) target = $region90
          $region89: #{neumf_forward.1} parent=85 // pred_region
            // Predicated region
            $region91: #{neumf_forward.1} parent=89 // pred_check
              _
            $region92: #{neumf_forward.1} parent=89 // pred_check_branch
              %425 = sbr.rel (0) target = $region94
            $region93: #{neumf_forward.1} parent=89 // pred_region
              %s426 = scalar_lea.vmem %s421, 8
              %s427 = scalar_lea.vmem %s418, 8 [#allocation4]
              loop: start=0, step=1, limit=1
              $region95: #{neumf_forward.1} parent=93 // loop_pre_header
                _
              $region96: #{neumf_forward.1} parent=93 // loop_header
                %s429 = sphi 0, %s433
                %p430 = scmp.ge.s32.totalorder %s429, 1
                %s434 = sphi %s421, %s421
                %s435 = sphi %s418, %s418
              $region97: #{neumf_forward.1} parent=93 // loop_header_branch
                %432 = sbr.rel (%p430) target = $region101
              $region98: #{neumf_forward.1} parent=93 // loop_body
                %v436 = vld [vmem:[%s434] sm:$0xff]
                %437 = vst [vmem:[%s435] sm:$0xff] %v436
                %v438 = vld [vmem:[%s434 + $0x18] sm:$0xff]
                %439 = vst [vmem:[%s435 + $0xc] sm:$0xff] %v438
                %v440 = vld [vmem:[%s434 + $0x30] sm:$0xff]
                %441 = vst [vmem:[%s435 + $0x18] sm:$0xff] %v440
                %v442 = vld [vmem:[%s434 + $0x48] sm:$0xff]
                %443 = vst [vmem:[%s435 + $0x24] sm:$0xff] %v442
                %v444 = vld [vmem:[%s434 + $0x60] sm:$0xff]
                %445 = vst [vmem:[%s435 + $0x30] sm:$0xff] %v444
              $region99: #{neumf_forward.1} parent=93 // loop_footer
                %s433 = sadd.s32 1, %s429
              $region100: #{neumf_forward.1} parent=93 // loop_footer_branch
                %428 = sbr.rel target = $region96
              $region101: #{neumf_forward.1} parent=93 // loop_exit
                _
              %s447 = ssub.s32 16, 1
              loop: start=0, step=1, limit=1
              $region102: #{neumf_forward.1} parent=93 // loop_pre_header
                _
              $region103: #{neumf_forward.1} parent=93 // loop_header
                %s449 = sphi 0, %s453
                %p450 = scmp.ge.s32.totalorder %s449, 1
                %s454 = sphi %s426, %s426
                %s455 = sphi %s427, %s427
              $region104: #{neumf_forward.1} parent=93 // loop_header_branch
                %452 = sbr.rel (%p450) target = $region108
              $region105: #{neumf_forward.1} parent=93 // loop_body
                %v456 = vld [vmem:[%s454] sm:%s447]
                %457 = vst [vmem:[%s455] sm:%s447] %v456
                %v458 = vld [vmem:[%s454 + $0x18] sm:%s447]
                %459 = vst [vmem:[%s455 + $0xc] sm:%s447] %v458
                %v460 = vld [vmem:[%s454 + $0x30] sm:%s447]
                %461 = vst [vmem:[%s455 + $0x18] sm:%s447] %v460
                %v462 = vld [vmem:[%s454 + $0x48] sm:%s447]
                %463 = vst [vmem:[%s455 + $0x24] sm:%s447] %v462
                %v464 = vld [vmem:[%s454 + $0x60] sm:%s447]
                %465 = vst [vmem:[%s455 + $0x30] sm:%s447] %v464
              $region106: #{neumf_forward.1} parent=93 // loop_footer
                %s453 = sadd.s32 1, %s449
              $region107: #{neumf_forward.1} parent=93 // loop_footer_branch
                %448 = sbr.rel target = $region103
              $region108: #{neumf_forward.1} parent=93 // loop_exit
                _
            $region94: #{neumf_forward.1} parent=89 // pred_fallthru
              _
          $region90: #{neumf_forward.1} parent=85 // pred_fallthru
            _
          %466 = vnop
        $region86: #{neumf_forward.1} parent=55 // pred_fallthru
          _
      $region56: #{neumf_forward.1} parent=5 // pred_fallthru
        _
      %p467 = scmp.le.s32.totalorder 1, %s20
      %p468 = scmp.lt.s32.totalorder %s20, 3
      %p469 = pnand %p467, %p468
      %p470 = pneg %p469
      // Predicated region
      $region109: #{neumf_forward.1} parent=5 // pred_check
        _
      $region110: #{neumf_forward.1} parent=5 // pred_check_branch
        %472 = sbr.rel (%p469) target = $region112
      $region111: #{neumf_forward.1} parent=5 // pred_region
        %s473 = ssub.s32 %s20, 1
        %s474 = sand.u32 %s33, 1
        %s475 = sand.u32 %s33, 1
        %s476 = smul.addr %s475, 60
        %s477 = scalar_lea.vmem [#allocation3], %s476
        // Predicated region
        $region113: #{neumf_forward.1} parent=111 // pred_check
          %p478 = pneg %p46
        $region114: #{neumf_forward.1} parent=111 // pred_check_branch
          %480 = sbr.rel (%p478) target = $region116
        $region115: #{neumf_forward.1} parent=111 // pred_region
          _
        $region116: #{neumf_forward.1} parent=111 // pred_fallthru
          _
        %s481 = sand.u32 %s59, 1
        %s482 = sand.u32 %s59, 1
        %s483 = smul.addr %s482, 60
        %s484 = scalar_lea.vmem [#allocation4], %s483
        // Predicated region
        $region117: #{neumf_forward.1} parent=111 // pred_check
          %p485 = pneg %p72
        $region118: #{neumf_forward.1} parent=111 // pred_check_branch
          %487 = sbr.rel (%p485) target = $region120
        $region119: #{neumf_forward.1} parent=111 // pred_region
          _
        $region120: #{neumf_forward.1} parent=111 // pred_fallthru
          _
        %s488 = sand.u32 %s33, 1
        %s489 = sand.u32 %s33, 1
        %s490 = smul.addr %s489, 60
        %s491 = scalar_lea.vmem [#allocation3], %s490
        %p492 = pneg %p46
        %p493 = pneg %p43
        %s494 = sand.u32 %s59, 1
        %s495 = sand.u32 %s59, 1
        %s496 = smul.addr %s495, 60
        %s497 = scalar_lea.vmem [#allocation4], %s496
        %p498 = pneg %p72
        %p499 = pneg %p69
        %p500 = pneg %p93
        %p501 = pneg %p90
        %p502 = pneg %p114
        %p503 = pneg %p111
        %p504 = pneg %p135
        %p505 = pneg %p132
        %p506 = pneg %p156
        %p507 = pneg %p153
        %p508 = pneg %p177
        %p509 = pneg %p174
        %p510 = pneg %p198
        %p511 = pneg %p195
        %p512 = pneg %p219
        %p513 = pneg %p216
        %p514 = pneg %p240
        %p515 = pneg %p237
        %p516 = pneg %p261
        %p517 = pneg %p258
        %p518 = pneg %p282
        %p519 = pneg %p279
        %p520 = pneg %p308
        %p521 = pneg %p305
        %s522 = smul.u32 3, %s25
        %p523 = scmp.lt.s32.totalorder %s522, 5
        %s524 = scalar_select %p523, %s522, 5
        %s525 = scalar_lea.vmem %s12, %s524
        %s526 = smul.u32 3, %s25
        %s527 = smul.u32 3, %s25
        %s528 = smul.u32 3, %s25
        %p529 = scmp.lt.s32.totalorder %s528, 5
        %s530 = scalar_select %p529, %s528, 5
        %s531 = scalar_lea.vmem %s12, %s530
        %s532 = smul.u32 3, %s25
        %v534 = vld [vmem:[%s477] sm:$0xff]
        %v535 = vld [vmem:[%s477 + $0x8] sm:$0xf]
        %v536 = vld [vmem:[%s477 + $0xc] sm:$0xff]
        %v537 = vld [vmem:[%s477 + $0x14] sm:$0xf]
        %v538 = vld [vmem:[%s477 + $0x18] sm:$0xff]
        %v539 = vld [vmem:[%s477 + $0x20] sm:$0xf]
        %v540 = vld [vmem:[%s477 + $0x24] sm:$0xff]
        %v541 = vld [vmem:[%s477 + $0x2c] sm:$0xf]
        %v542 = vld [vmem:[%s477 + $0x30] sm:$0xff]
        %v543 = vld [vmem:[%s477 + $0x38] sm:$0xf]
        %v544 = vld [vmem:[%s484] sm:$0xff]
        %v545 = vld [vmem:[%s484 + $0x8] sm:$0xf]
        %v546 = vld [vmem:[%s484 + $0xc] sm:$0xff]
        %v547 = vld [vmem:[%s484 + $0x14] sm:$0xf]
        %v548 = vld [vmem:[%s484 + $0x18] sm:$0xff]
        %v549 = vld [vmem:[%s484 + $0x20] sm:$0xf]
        %v550 = vld [vmem:[%s484 + $0x24] sm:$0xff]
        %v551 = vld [vmem:[%s484 + $0x2c] sm:$0xf]
        %v552 = vld [vmem:[%s484 + $0x30] sm:$0xff]
        %v553 = vld [vmem:[%s484 + $0x38] sm:$0xf]
        %v554 = vld [vmem:[%s2] sm:$0xf]
        %v555 = vld [vmem:[%s2 + $0x4] sm:$0xf]
        %v556 = vld [vmem:[%s2 + $0x8] sm:$0xf]
        %v557 = vld [vmem:[%s2 + $0xc] sm:$0xf]
        %v558 = vld [vmem:[%s3] sm:$0xf]
        %v559 = vld [vmem:[%s3 + $0x4] sm:$0xf]
        %v560 = vld [vmem:[%s3 + $0x8] sm:$0xf]
        %v561 = vld [vmem:[%s3 + $0xc] sm:$0xf]
        %v566 = vunpack.c.l.b16 %v558
        %v567 = vunpack.c.l.b16 %v559
        %v568 = vunpack.c.l.b16 %v560
        %v569 = vunpack.c.l.b16 %v561
        %v570 = vpack.c.b16 %v567, %v566
        %v571 = vpack.c.b16 %v569, %v568
        %v582 = vunpack.c.l.b16 %v544
        %v583 = vunpack.c.h.b16 %v544
        %v584 = vunpack.c.l.b16 %v545
        %v585 = vunpack.c.l.b16 %v546
        %v586 = vunpack.c.h.b16 %v546
        %v587 = vunpack.c.l.b16 %v547
        %v588 = vunpack.c.l.b16 %v548
        %v589 = vunpack.c.h.b16 %v548
        %v590 = vunpack.c.l.b16 %v549
        %v591 = vunpack.c.l.b16 %v550
        %v592 = vunpack.c.h.b16 %v550
        %v593 = vunpack.c.l.b16 %v551
        %v594 = vunpack.c.l.b16 %v552
        %v595 = vunpack.c.h.b16 %v552
        %v596 = vunpack.c.l.b16 %v553
        %v597 = vpack.c.b16 %v585, %v582
        %v598 = vpack.c.b16 %v586, %v583
        %v599 = vpack.c.b16 %v587, %v584
        %v600 = vpack.c.b16 %v591, %v588
        %v601 = vpack.c.b16 %v592, %v589
        %v602 = vpack.c.b16 %v593, %v590
        %v603 = vpack.c.b16 %v594, %v594
        %v604 = vpack.c.b16 %v595, %v595
        %v605 = vpack.c.b16 %v596, %v596
        %vm612 = vcmask 326656
        %v614 = vsel %vm612, %v570, 0
        %v617 = vsel %vm612, %v571, 0
        %vm619 = vcmask 1043456
        %v621 = vsel %vm619, %v603, 0
        %v624 = vsel %vm619, %v604, 0
        %v627 = vsel %vm619, %v605, 0
        %629 = vmatprep.subr.bf16.mxu0 0
        %630 = vmatpush1.bf16.msra.mxu0 0
        %631 = vmatprep.subr.bf16.mxu0 0
        %632 = vmatpush1.bf16.msra.mxu0 0
        %633 = vmatprep.subr.bf16.mxu0 0
        %634 = vmatpush1.bf16.msra.mxu0 0
        %635 = vmatprep.subr.bf16.mxu0 0
        %636 = vmatpush1.bf16.msra.mxu0 0
        %637 = vmatprep.subr.bf16.mxu0 0
        %638 = vmatpush1.bf16.msra.mxu0 0
        %639 = vmatprep.subr.bf16.mxu0 %v624
        %640 = vmatpush1.bf16.msra.mxu0 %v621
        %641 = vmatprep.subr.bf16.mxu0 %v601
        %642 = vmatpush1.bf16.msra.mxu0 %v600
        %643 = vmatprep.subr.bf16.mxu0 %v598
        %644 = vmatpush1.bf16.msra.mxu0 %v597
        %645 = vmatprep.subr.bf16.mxu0 0
        %646 = vmatpush2.bf16.msra.mxu0 0
        %647 = vmatprep.subr.bf16.mxu0 0
        %648 = vmatpush2.bf16.msra.mxu0 0
        %649 = vmatprep.subr.bf16.mxu0 0
        %650 = vmatpush2.bf16.msra.mxu0 0
        %651 = vmatprep.subr.bf16.mxu0 0
        %652 = vmatpush2.bf16.msra.mxu0 0
        %653 = vmatprep.subr.bf16.mxu0 0
        %654 = vmatpush2.bf16.msra.mxu0 0
        %655 = vmatprep.subr.bf16.mxu0 0
        %656 = vmatpush2.bf16.msra.mxu0 0
        %657 = vmatprep.subr.bf16.mxu0 0
        %658 = vmatpush2.bf16.msra.mxu0 0
        %659 = vmatprep.subr.bf16.mxu0 0
        %660 = vmatpush2.bf16.msra.mxu0 0
        %661 = vmatprep.mubr.bf16.mxu0 0
        %662 = vmatmul.mubr.bf16.gmra.mxu0 %v614
        %v663 = vpop.f32.mrf.mxu0
        %v664 = vadd.f32 0.0, %v663
        %v665 = vpop.f32.mrf.mxu0
        %v666 = vadd.f32 0.0, %v665
        %v667 = vpop.f32.mrf.mxu0
        %v668 = vadd.f32 0.0, %v667
        %v669 = vpop.f32.mrf.mxu0
        %v670 = vadd.f32 0.0, %v669
        %671 = vmatprep.mubr.bf16.mxu0 0
        %672 = vmatmul.mubr.bf16.gmra.mxu0 %v617
        %v673 = vpop.f32.mrf.mxu0
        %v674 = vadd.f32 0.0, %v673
        %v675 = vpop.f32.mrf.mxu0
        %v676 = vadd.f32 0.0, %v675
        %v677 = vpop.f32.mrf.mxu0
        %v678 = vadd.f32 0.0, %v677
        %v679 = vpop.f32.mrf.mxu0
        %v680 = vadd.f32 0.0, %v679
        %681 = vdwg.mxu0
        %682 = vmatprep.subr.bf16.mxu0 0
        %683 = vmatpush1.bf16.msra.mxu0 0
        %684 = vmatprep.subr.bf16.mxu0 0
        %685 = vmatpush1.bf16.msra.mxu0 0
        %686 = vmatprep.subr.bf16.mxu0 0
        %687 = vmatpush1.bf16.msra.mxu0 0
        %688 = vmatprep.subr.bf16.mxu0 0
        %689 = vmatpush1.bf16.msra.mxu0 0
        %690 = vmatprep.subr.bf16.mxu0 0
        %691 = vmatpush1.bf16.msra.mxu0 0
        %692 = vmatprep.subr.bf16.mxu0 0
        %693 = vmatpush1.bf16.msra.mxu0 %v627
        %694 = vmatprep.subr.bf16.mxu0 0
        %695 = vmatpush1.bf16.msra.mxu0 %v602
        %696 = vmatprep.subr.bf16.mxu0 0
        %697 = vmatpush1.bf16.msra.mxu0 %v599
        %698 = vmatprep.subr.bf16.mxu0 0
        %699 = vmatpush2.bf16.msra.mxu0 0
        %700 = vmatprep.subr.bf16.mxu0 0
        %701 = vmatpush2.bf16.msra.mxu0 0
        %702 = vmatprep.subr.bf16.mxu0 0
        %703 = vmatpush2.bf16.msra.mxu0 0
        %704 = vmatprep.subr.bf16.mxu0 0
        %705 = vmatpush2.bf16.msra.mxu0 0
        %706 = vmatprep.subr.bf16.mxu0 0
        %707 = vmatpush2.bf16.msra.mxu0 0
        %708 = vmatprep.subr.bf16.mxu0 0
        %709 = vmatpush2.bf16.msra.mxu0 0
        %710 = vmatprep.subr.bf16.mxu0 0
        %711 = vmatpush2.bf16.msra.mxu0 0
        %712 = vmatprep.subr.bf16.mxu0 0
        %713 = vmatpush2.bf16.msra.mxu0 0
        %714 = vmatprep.mubr.bf16.mxu0 0
        %715 = vmatmul.mubr.bf16.gmra.mxu0 %v614
        %v716 = vpop.f32.mrf.mxu0
        %v717 = vadd.f32 0.0, %v716
        %v718 = vpop.f32.mrf.mxu0
        %v719 = vpop.f32.mrf.mxu0
        %v720 = vadd.f32 0.0, %v719
        %v721 = vpop.f32.mrf.mxu0
        %722 = vmatprep.mubr.bf16.mxu0 0
        %723 = vmatmul.mubr.bf16.gmra.mxu0 %v617
        %v724 = vpop.f32.mrf.mxu0
        %v725 = vadd.f32 0.0, %v724
        %v726 = vpop.f32.mrf.mxu0
        %v727 = vpop.f32.mrf.mxu0
        %v728 = vadd.f32 0.0, %v727
        %v729 = vpop.f32.mrf.mxu0
        %730 = vdwg.mxu0
        %v735 = vunpack.c.l.b16 %v554
        %v736 = vunpack.c.l.b16 %v555
        %v737 = vunpack.c.l.b16 %v556
        %v738 = vunpack.c.l.b16 %v557
        %v739 = vpack.c.b16 %v736, %v735
        %v740 = vpack.c.b16 %v738, %v737
        %v751 = vunpack.c.l.b16 %v534
        %v752 = vunpack.c.h.b16 %v534
        %v753 = vunpack.c.l.b16 %v535
        %v754 = vunpack.c.l.b16 %v536
        %v755 = vunpack.c.h.b16 %v536
        %v756 = vunpack.c.l.b16 %v537
        %v757 = vunpack.c.l.b16 %v538
        %v758 = vunpack.c.h.b16 %v538
        %v759 = vunpack.c.l.b16 %v539
        %v760 = vunpack.c.l.b16 %v540
        %v761 = vunpack.c.h.b16 %v540
        %v762 = vunpack.c.l.b16 %v541
        %v763 = vunpack.c.l.b16 %v542
        %v764 = vunpack.c.h.b16 %v542
        %v765 = vunpack.c.l.b16 %v543
        %v766 = vpack.c.b16 %v754, %v751
        %v767 = vpack.c.b16 %v755, %v752
        %v768 = vpack.c.b16 %v756, %v753
        %v769 = vpack.c.b16 %v760, %v757
        %v770 = vpack.c.b16 %v761, %v758
        %v771 = vpack.c.b16 %v762, %v759
        %v772 = vpack.c.b16 %v763, %v763
        %v773 = vpack.c.b16 %v764, %v764
        %v774 = vpack.c.b16 %v765, %v765
        %v782 = vsel %vm612, %v739, 0
        %v785 = vsel %vm612, %v740, 0
        %v788 = vsel %vm619, %v772, 0
        %v791 = vsel %vm619, %v773, 0
        %v794 = vsel %vm619, %v774, 0
        %796 = vmatprep.subr.bf16.mxu0 0
        %797 = vmatpush1.bf16.msra.mxu0 0
        %798 = vmatprep.subr.bf16.mxu0 0
        %799 = vmatpush1.bf16.msra.mxu0 0
        %800 = vmatprep.subr.bf16.mxu0 0
        %801 = vmatpush1.bf16.msra.mxu0 0
        %802 = vmatprep.subr.bf16.mxu0 0
        %803 = vmatpush1.bf16.msra.mxu0 0
        %804 = vmatprep.subr.bf16.mxu0 0
        %805 = vmatpush1.bf16.msra.mxu0 0
        %806 = vmatprep.subr.bf16.mxu0 %v791
        %807 = vmatpush1.bf16.msra.mxu0 %v788
        %808 = vmatprep.subr.bf16.mxu0 %v770
        %809 = vmatpush1.bf16.msra.mxu0 %v769
        %810 = vmatprep.subr.bf16.mxu0 %v767
        %811 = vmatpush1.bf16.msra.mxu0 %v766
        %812 = vmatprep.subr.bf16.mxu0 0
        %813 = vmatpush2.bf16.msra.mxu0 0
        %814 = vmatprep.subr.bf16.mxu0 0
        %815 = vmatpush2.bf16.msra.mxu0 0
        %816 = vmatprep.subr.bf16.mxu0 0
        %817 = vmatpush2.bf16.msra.mxu0 0
        %818 = vmatprep.subr.bf16.mxu0 0
        %819 = vmatpush2.bf16.msra.mxu0 0
        %820 = vmatprep.subr.bf16.mxu0 0
        %821 = vmatpush2.bf16.msra.mxu0 0
        %822 = vmatprep.subr.bf16.mxu0 0
        %823 = vmatpush2.bf16.msra.mxu0 0
        %824 = vmatprep.subr.bf16.mxu0 0
        %825 = vmatpush2.bf16.msra.mxu0 0
        %826 = vmatprep.subr.bf16.mxu0 0
        %827 = vmatpush2.bf16.msra.mxu0 0
        %828 = vmatprep.mubr.bf16.mxu0 0
        %829 = vmatmul.mubr.bf16.gmra.mxu0 %v782
        %v830 = vpop.f32.mrf.mxu0
        %v831 = vadd.f32 %v664, %v830
        %v832 = vpop.f32.mrf.mxu0
        %v833 = vadd.f32 %v666, %v832
        %v834 = vpop.f32.mrf.mxu0
        %v835 = vadd.f32 %v668, %v834
        %v836 = vpop.f32.mrf.mxu0
        %v837 = vadd.f32 %v670, %v836
        %838 = vmatprep.mubr.bf16.mxu0 0
        %839 = vmatmul.mubr.bf16.gmra.mxu0 %v785
        %v840 = vpop.f32.mrf.mxu0
        %v841 = vadd.f32 %v674, %v840
        %v842 = vpop.f32.mrf.mxu0
        %v843 = vadd.f32 %v676, %v842
        %v844 = vpop.f32.mrf.mxu0
        %v845 = vadd.f32 %v678, %v844
        %v846 = vpop.f32.mrf.mxu0
        %v847 = vadd.f32 %v680, %v846
        %848 = vdwg.mxu0
        %849 = vmatprep.subr.bf16.mxu0 0
        %850 = vmatpush1.bf16.msra.mxu0 0
        %851 = vmatprep.subr.bf16.mxu0 0
        %852 = vmatpush1.bf16.msra.mxu0 0
        %853 = vmatprep.subr.bf16.mxu0 0
        %854 = vmatpush1.bf16.msra.mxu0 0
        %855 = vmatprep.subr.bf16.mxu0 0
        %856 = vmatpush1.bf16.msra.mxu0 0
        %857 = vmatprep.subr.bf16.mxu0 0
        %858 = vmatpush1.bf16.msra.mxu0 0
        %859 = vmatprep.subr.bf16.mxu0 0
        %860 = vmatpush1.bf16.msra.mxu0 %v794
        %861 = vmatprep.subr.bf16.mxu0 0
        %862 = vmatpush1.bf16.msra.mxu0 %v771
        %863 = vmatprep.subr.bf16.mxu0 0
        %864 = vmatpush1.bf16.msra.mxu0 %v768
        %865 = vmatprep.subr.bf16.mxu0 0
        %866 = vmatpush2.bf16.msra.mxu0 0
        %867 = vmatprep.subr.bf16.mxu0 0
        %868 = vmatpush2.bf16.msra.mxu0 0
        %869 = vmatprep.subr.bf16.mxu0 0
        %870 = vmatpush2.bf16.msra.mxu0 0
        %871 = vmatprep.subr.bf16.mxu0 0
        %872 = vmatpush2.bf16.msra.mxu0 0
        %873 = vmatprep.subr.bf16.mxu0 0
        %874 = vmatpush2.bf16.msra.mxu0 0
        %875 = vmatprep.subr.bf16.mxu0 0
        %876 = vmatpush2.bf16.msra.mxu0 0
        %877 = vmatprep.subr.bf16.mxu0 0
        %878 = vmatpush2.bf16.msra.mxu0 0
        %879 = vmatprep.subr.bf16.mxu0 0
        %880 = vmatpush2.bf16.msra.mxu0 0
        %881 = vmatprep.mubr.bf16.mxu0 0
        %882 = vmatmul.mubr.bf16.gmra.mxu0 %v782
        %v883 = vpop.f32.mrf.mxu0
        %v884 = vadd.f32 %v717, %v883
        %v885 = vpop.f32.mrf.mxu0
        %v886 = vpop.f32.mrf.mxu0
        %v887 = vadd.f32 %v720, %v886
        %v888 = vpop.f32.mrf.mxu0
        %889 = vmatprep.mubr.bf16.mxu0 0
        %890 = vmatmul.mubr.bf16.gmra.mxu0 %v785
        %v891 = vpop.f32.mrf.mxu0
        %v892 = vadd.f32 %v725, %v891
        %v893 = vpop.f32.mrf.mxu0
        %v894 = vpop.f32.mrf.mxu0
        %v895 = vadd.f32 %v728, %v894
        %v896 = vpop.f32.mrf.mxu0
        %897 = vdwg.mxu0
        %v898 = vld [vmem:[%s4] sm:$0xff]
        %v899 = vld [vmem:[%s4 + $0x8] sm:$0xff]
        %v900 = vld [vmem:[%s4 + $0x10] sm:$0xff]
        %v901 = vld [vmem:[%s4 + $0x18] sm:$0xff]
        %903 = vset.pattern.permute.xlu0 0
        %904 = vperm.xlu0 %903, %v898
        %v905 = vpop.permute.xlu0 %904
        %908 = vset.pattern.permute.xlu0 0
        %909 = vperm.xlu0 %908, %v899
        %v910 = vpop.permute.xlu0 %909
        %913 = vset.pattern.permute.xlu0 0
        %914 = vperm.xlu0 %913, %v900
        %v915 = vpop.permute.xlu0 %914
        %918 = vset.pattern.permute.xlu0 0
        %919 = vperm.xlu0 %918, %v901
        %v920 = vpop.permute.xlu0 %919
        %v922 = vadd.f32 %v831, %v905
        %v923 = vadd.f32 %v833, %v905
        %v924 = vadd.f32 %v884, %v905
        %v925 = vadd.f32 %v835, %v910
        %v926 = vadd.f32 %v837, %v910
        %v927 = vadd.f32 %v887, %v910
        %v928 = vadd.f32 %v841, %v915
        %v929 = vadd.f32 %v843, %v915
        %v930 = vadd.f32 %v892, %v915
        %v931 = vadd.f32 %v845, %v920
        %v932 = vadd.f32 %v847, %v920
        %v933 = vadd.f32 %v895, %v920
        %v934 = vmax.f32 %v922, 0.0
        %v935 = vmax.f32 %v923, 0.0
        %v936 = vmax.f32 %v924, 0.0
        %v937 = vmax.f32 %v925, 0.0
        %v938 = vmax.f32 %v926, 0.0
        %v939 = vmax.f32 %v927, 0.0
        %v940 = vmax.f32 %v928, 0.0
        %v941 = vmax.f32 %v929, 0.0
        %v942 = vmax.f32 %v930, 0.0
        %v943 = vmax.f32 %v931, 0.0
        %v944 = vmax.f32 %v932, 0.0
        %v945 = vmax.f32 %v933, 0.0
        %v946 = vld [vmem:[%s5] sm:$0xf]
        %v947 = vld [vmem:[%s5 + $0x4] sm:$0xf]
        %v948 = vpack.c.bf16 %v937, %v934
        %v949 = vpack.c.bf16 %v938, %v935
        %v950 = vpack.c.bf16 %v939, %v936
        %v951 = vpack.c.bf16 %v943, %v940
        %v952 = vpack.c.bf16 %v944, %v941
        %v953 = vpack.c.bf16 %v945, %v942
        %v954 = vld [vmem:[%s6] sm:$0xff]
        %v955 = vld [vmem:[%s6 + $0x8] sm:$0xff]
        %957 = vset.pattern.permute.xlu0 0
        %958 = vperm.xlu0 %957, %v954
        %v959 = vpop.permute.xlu0 %958
        %962 = vset.pattern.permute.xlu0 0
        %963 = vperm.xlu0 %962, %v955
        %v964 = vpop.permute.xlu0 %963
        %v968 = vunpack.c.l.b16 %v946
        %v969 = vunpack.c.l.b16 %v947
        %v970 = vpack.c.b16 %v969, %v968
        %vm971 = vcmask 261120
        %v973 = vsel %vm971, %v970, 0
        %975 = vmatprep.subr.bf16.mxu0 0
        %976 = vmatpush1.bf16.msra.mxu0 0
        %977 = vmatprep.subr.bf16.mxu0 0
        %978 = vmatpush1.bf16.msra.mxu0 0
        %979 = vmatprep.subr.bf16.mxu0 0
        %980 = vmatpush1.bf16.msra.mxu0 0
        %981 = vmatprep.subr.bf16.mxu0 0
        %982 = vmatpush1.bf16.msra.mxu0 0
        %983 = vmatprep.subr.bf16.mxu0 0
        %984 = vmatpush1.bf16.msra.mxu0 0
        %985 = vmatprep.subr.bf16.mxu0 0
        %986 = vmatpush1.bf16.msra.mxu0 0
        %987 = vmatprep.subr.bf16.mxu0 %v952
        %988 = vmatpush1.bf16.msra.mxu0 %v951
        %989 = vmatprep.subr.bf16.mxu0 %v949
        %990 = vmatpush1.bf16.msra.mxu0 %v948
        %991 = vmatprep.subr.bf16.mxu0 0
        %992 = vmatpush2.bf16.msra.mxu0 0
        %993 = vmatprep.subr.bf16.mxu0 0
        %994 = vmatpush2.bf16.msra.mxu0 0
        %995 = vmatprep.subr.bf16.mxu0 0
        %996 = vmatpush2.bf16.msra.mxu0 0
        %997 = vmatprep.subr.bf16.mxu0 0
        %998 = vmatpush2.bf16.msra.mxu0 0
        %999 = vmatprep.subr.bf16.mxu0 0
        %1000 = vmatpush2.bf16.msra.mxu0 0
        %1001 = vmatprep.subr.bf16.mxu0 0
        %1002 = vmatpush2.bf16.msra.mxu0 0
        %1003 = vmatprep.subr.bf16.mxu0 0
        %1004 = vmatpush2.bf16.msra.mxu0 0
        %1005 = vmatprep.subr.bf16.mxu0 0
        %1006 = vmatpush2.bf16.msra.mxu0 0
        %1007 = vmatprep.mubr.bf16.mxu0 0
        %1008 = vmatmul.mubr.bf16.gmra.mxu0 %v973
        %v1009 = vpop.f32.mrf.mxu0
        %v1010 = vadd.f32 %v959, %v1009
        %v1011 = vpop.f32.mrf.mxu0
        %v1012 = vadd.f32 %v959, %v1011
        %v1013 = vpop.f32.mrf.mxu0
        %v1014 = vadd.f32 %v964, %v1013
        %v1015 = vpop.f32.mrf.mxu0
        %v1016 = vadd.f32 %v964, %v1015
        %1017 = vdwg.mxu0
        %1018 = vmatprep.subr.bf16.mxu0 0
        %1019 = vmatpush1.bf16.msra.mxu0 0
        %1020 = vmatprep.subr.bf16.mxu0 0
        %1021 = vmatpush1.bf16.msra.mxu0 0
        %1022 = vmatprep.subr.bf16.mxu0 0
        %1023 = vmatpush1.bf16.msra.mxu0 0
        %1024 = vmatprep.subr.bf16.mxu0 0
        %1025 = vmatpush1.bf16.msra.mxu0 0
        %1026 = vmatprep.subr.bf16.mxu0 0
        %1027 = vmatpush1.bf16.msra.mxu0 0
        %1028 = vmatprep.subr.bf16.mxu0 0
        %1029 = vmatpush1.bf16.msra.mxu0 0
        %1030 = vmatprep.subr.bf16.mxu0 0
        %1031 = vmatpush1.bf16.msra.mxu0 %v953
        %1032 = vmatprep.subr.bf16.mxu0 0
        %1033 = vmatpush1.bf16.msra.mxu0 %v950
        %1034 = vmatprep.subr.bf16.mxu0 0
        %1035 = vmatpush2.bf16.msra.mxu0 0
        %1036 = vmatprep.subr.bf16.mxu0 0
        %1037 = vmatpush2.bf16.msra.mxu0 0
        %1038 = vmatprep.subr.bf16.mxu0 0
        %1039 = vmatpush2.bf16.msra.mxu0 0
        %1040 = vmatprep.subr.bf16.mxu0 0
        %1041 = vmatpush2.bf16.msra.mxu0 0
        %1042 = vmatprep.subr.bf16.mxu0 0
        %1043 = vmatpush2.bf16.msra.mxu0 0
        %1044 = vmatprep.subr.bf16.mxu0 0
        %1045 = vmatpush2.bf16.msra.mxu0 0
        %1046 = vmatprep.subr.bf16.mxu0 0
        %1047 = vmatpush2.bf16.msra.mxu0 0
        %1048 = vmatprep.subr.bf16.mxu0 0
        %1049 = vmatpush2.bf16.msra.mxu0 0
        %1050 = vmatprep.mubr.bf16.mxu0 0
        %1051 = vmatmul.mubr.bf16.gmra.mxu0 %v973
        %v1052 = vpop.f32.mrf.mxu0
        %v1053 = vadd.f32 %v959, %v1052
        %v1054 = vpop.f32.mrf.mxu0
        %v1055 = vpop.f32.mrf.mxu0
        %v1056 = vadd.f32 %v964, %v1055
        %v1057 = vpop.f32.mrf.mxu0
        %1058 = vdwg.mxu0
        %v1059 = vmax.f32 %v1010, 0.0
        %v1060 = vmax.f32 %v1012, 0.0
        %v1061 = vmax.f32 %v1053, 0.0
        %v1062 = vmax.f32 %v1014, 0.0
        %v1063 = vmax.f32 %v1016, 0.0
        %v1064 = vmax.f32 %v1056, 0.0
        %v1065 = vld [vmem:[%s7] sm:$0xf]
        %v1066 = vpack.c.bf16 %v1062, %v1059
        %v1067 = vpack.c.bf16 %v1063, %v1060
        %v1068 = vpack.c.bf16 %v1064, %v1061
        %v1069 = vld [vmem:[%s8] sm:$0xff]
        %1071 = vset.pattern.permute.xlu0 0
        %1072 = vperm.xlu0 %1071, %v1069
        %v1073 = vpop.permute.xlu0 %1072
        %vm1075 = vcmask 130048
        %v1077 = vsel %vm1075, %v1065, 0
        %1079 = vmatprep.subr.bf16.mxu0 0
        %1080 = vmatpush1.bf16.msra.mxu0 0
        %1081 = vmatprep.subr.bf16.mxu0 0
        %1082 = vmatpush1.bf16.msra.mxu0 0
        %1083 = vmatprep.subr.bf16.mxu0 0
        %1084 = vmatpush1.bf16.msra.mxu0 0
        %1085 = vmatprep.subr.bf16.mxu0 0
        %1086 = vmatpush1.bf16.msra.mxu0 0
        %1087 = vmatprep.subr.bf16.mxu0 0
        %1088 = vmatpush1.bf16.msra.mxu0 0
        %1089 = vmatprep.subr.bf16.mxu0 0
        %1090 = vmatpush1.bf16.msra.mxu0 0
        %1091 = vmatprep.subr.bf16.mxu0 0
        %1092 = vmatpush1.bf16.msra.mxu0 0
        %1093 = vmatprep.subr.bf16.mxu0 %v1067
        %1094 = vmatpush1.bf16.msra.mxu0 %v1066
        %1095 = vmatprep.subr.bf16.mxu0 0
        %1096 = vmatpush2.bf16.msra.mxu0 0
        %1097 = vmatprep.subr.bf16.mxu0 0
        %1098 = vmatpush2.bf16.msra.mxu0 0
        %1099 = vmatprep.subr.bf16.mxu0 0
        %1100 = vmatpush2.bf16.msra.mxu0 0
        %1101 = vmatprep.subr.bf16.mxu0 0
        %1102 = vmatpush2.bf16.msra.mxu0 0
        %1103 = vmatprep.subr.bf16.mxu0 0
        %1104 = vmatpush2.bf16.msra.mxu0 0
        %1105 = vmatprep.subr.bf16.mxu0 0
        %1106 = vmatpush2.bf16.msra.mxu0 0
        %1107 = vmatprep.subr.bf16.mxu0 0
        %1108 = vmatpush2.bf16.msra.mxu0 0
        %1109 = vmatprep.subr.bf16.mxu0 0
        %1110 = vmatpush2.bf16.msra.mxu0 0
        %1111 = vmatprep.mubr.bf16.mxu0 0
        %1112 = vmatmul.mubr.bf16.gmra.mxu0 %v1077
        %v1113 = vpop.f32.mrf.mxu0
        %v1114 = vadd.f32 %v1073, %v1113
        %v1115 = vpop.f32.mrf.mxu0
        %v1116 = vadd.f32 %v1073, %v1115
        %v1117 = vpop.f32.mrf.mxu0
        %v1118 = vpop.f32.mrf.mxu0
        %1119 = vdwg.mxu0
        %1120 = vmatprep.subr.bf16.mxu0 0
        %1121 = vmatpush1.bf16.msra.mxu0 0
        %1122 = vmatprep.subr.bf16.mxu0 0
        %1123 = vmatpush1.bf16.msra.mxu0 0
        %1124 = vmatprep.subr.bf16.mxu0 0
        %1125 = vmatpush1.bf16.msra.mxu0 0
        %1126 = vmatprep.subr.bf16.mxu0 0
        %1127 = vmatpush1.bf16.msra.mxu0 0
        %1128 = vmatprep.subr.bf16.mxu0 0
        %1129 = vmatpush1.bf16.msra.mxu0 0
        %1130 = vmatprep.subr.bf16.mxu0 0
        %1131 = vmatpush1.bf16.msra.mxu0 0
        %1132 = vmatprep.subr.bf16.mxu0 0
        %1133 = vmatpush1.bf16.msra.mxu0 0
        %1134 = vmatprep.subr.bf16.mxu0 0
        %1135 = vmatpush1.bf16.msra.mxu0 %v1068
        %1136 = vmatprep.subr.bf16.mxu0 0
        %1137 = vmatpush2.bf16.msra.mxu0 0
        %1138 = vmatprep.subr.bf16.mxu0 0
        %1139 = vmatpush2.bf16.msra.mxu0 0
        %1140 = vmatprep.subr.bf16.mxu0 0
        %1141 = vmatpush2.bf16.msra.mxu0 0
        %1142 = vmatprep.subr.bf16.mxu0 0
        %1143 = vmatpush2.bf16.msra.mxu0 0
        %1144 = vmatprep.subr.bf16.mxu0 0
        %1145 = vmatpush2.bf16.msra.mxu0 0
        %1146 = vmatprep.subr.bf16.mxu0 0
        %1147 = vmatpush2.bf16.msra.mxu0 0
        %1148 = vmatprep.subr.bf16.mxu0 0
        %1149 = vmatpush2.bf16.msra.mxu0 0
        %1150 = vmatprep.subr.bf16.mxu0 0
        %1151 = vmatpush2.bf16.msra.mxu0 0
        %1152 = vmatprep.mubr.bf16.mxu0 0
        %1153 = vmatmul.mubr.bf16.gmra.mxu0 %v1077
        %v1154 = vpop.f32.mrf.mxu0
        %v1155 = vadd.f32 %v1073, %v1154
        %v1156 = vpop.f32.mrf.mxu0
        %v1157 = vpop.f32.mrf.mxu0
        %v1158 = vpop.f32.mrf.mxu0
        %1159 = vdwg.mxu0
        %v1160 = vmax.f32 %v1114, 0.0
        %v1161 = vmax.f32 %v1116, 0.0
        %v1162 = vmax.f32 %v1155, 0.0
        %v1163 = vunpack.c.l.bf16 %v534
        %v1164 = vunpack.c.h.bf16 %v534
        %v1165 = vunpack.c.l.bf16 %v535
        %v1166 = vunpack.c.l.bf16 %v536
        %v1167 = vunpack.c.h.bf16 %v536
        %v1168 = vunpack.c.l.bf16 %v537
        %v1169 = vunpack.c.l.bf16 %v538
        %v1170 = vunpack.c.h.bf16 %v538
        %v1171 = vunpack.c.l.bf16 %v539
        %v1172 = vunpack.c.l.bf16 %v540
        %v1173 = vunpack.c.h.bf16 %v540
        %v1174 = vunpack.c.l.bf16 %v541
        %v1175 = vunpack.c.l.bf16 %v542
        %v1176 = vunpack.c.h.bf16 %v542
        %v1177 = vunpack.c.l.bf16 %v543
        %v1178 = vunpack.c.l.bf16 %v544
        %v1179 = vunpack.c.h.bf16 %v544
        %v1180 = vunpack.c.l.bf16 %v545
        %v1181 = vunpack.c.l.bf16 %v546
        %v1182 = vunpack.c.h.bf16 %v546
        %v1183 = vunpack.c.l.bf16 %v547
        %v1184 = vunpack.c.l.bf16 %v548
        %v1185 = vunpack.c.h.bf16 %v548
        %v1186 = vunpack.c.l.bf16 %v549
        %v1187 = vunpack.c.l.bf16 %v550
        %v1188 = vunpack.c.h.bf16 %v550
        %v1189 = vunpack.c.l.bf16 %v551
        %v1190 = vunpack.c.l.bf16 %v552
        %v1191 = vunpack.c.h.bf16 %v552
        %v1192 = vunpack.c.l.bf16 %v553
        %v1193 = vmul.f32 %v1163, %v1178
        %v1194 = vmul.f32 %v1164, %v1179
        %v1195 = vmul.f32 %v1165, %v1180
        %v1196 = vmul.f32 %v1166, %v1181
        %v1197 = vmul.f32 %v1167, %v1182
        %v1198 = vmul.f32 %v1168, %v1183
        %v1199 = vmul.f32 %v1169, %v1184
        %v1200 = vmul.f32 %v1170, %v1185
        %v1201 = vmul.f32 %v1171, %v1186
        %v1202 = vmul.f32 %v1172, %v1187
        %v1203 = vmul.f32 %v1173, %v1188
        %v1204 = vmul.f32 %v1174, %v1189
        %v1205 = vmul.f32 %v1175, %v1190
        %v1206 = vmul.f32 %v1176, %v1191
        %v1207 = vmul.f32 %v1177, %v1192
        %v1208 = vld [vmem:[%s9] sm:$0x1]
        %v1209 = vld [vmem:[%s10] sm:$0x1]
        %v1211 = vsel %vm612, %v1209, 0
        %1213 = vmatprep.subr.mxu0 0.0
        %1214 = vmatpush1.msra.mxu0 0.0
        %1215 = vmatprep.subr.mxu0 0.0
        %1216 = vmatpush1.msra.mxu0 0.0
        %1217 = vmatprep.subr.mxu0 0.0
        %1218 = vmatpush1.msra.mxu0 0.0
        %1219 = vmatprep.subr.mxu0 0.0
        %1220 = vmatpush1.msra.mxu0 0.0
        %1221 = vmatprep.subr.mxu0 0.0
        %1222 = vmatpush1.msra.mxu0 0.0
        %1223 = vmatprep.subr.mxu0 0.0
        %1224 = vmatpush1.msra.mxu0 0.0
        %1225 = vmatprep.subr.mxu0 0.0
        %1226 = vmatpush1.msra.mxu0 0.0
        %1227 = vmatprep.subr.mxu0 0.0
        %1228 = vmatpush1.msra.mxu0 0.0
        %1229 = vmatprep.subr.mxu0 0.0
        %1230 = vmatpush1.msra.mxu0 0.0
        %1231 = vmatprep.subr.mxu0 0.0
        %1232 = vmatpush1.msra.mxu0 0.0
        %1233 = vmatprep.subr.mxu0 0.0
        %1234 = vmatpush1.msra.mxu0 0.0
        %1235 = vmatprep.subr.mxu0 %v1206
        %1236 = vmatpush1.msra.mxu0 %v1205
        %1237 = vmatprep.subr.mxu0 %v1203
        %1238 = vmatpush1.msra.mxu0 %v1202
        %1239 = vmatprep.subr.mxu0 %v1200
        %1240 = vmatpush1.msra.mxu0 %v1199
        %1241 = vmatprep.subr.mxu0 %v1197
        %1242 = vmatpush1.msra.mxu0 %v1196
        %1243 = vmatprep.subr.mxu0 %v1194
        %1244 = vmatpush1.msra.mxu0 %v1193
        %1245 = vmatprep.subr.mxu0 0.0
        %1246 = vmatpush2.msra.mxu0 0.0
        %1247 = vmatprep.subr.mxu0 0.0
        %1248 = vmatpush2.msra.mxu0 0.0
        %1249 = vmatprep.subr.mxu0 0.0
        %1250 = vmatpush2.msra.mxu0 0.0
        %1251 = vmatprep.subr.mxu0 0.0
        %1252 = vmatpush2.msra.mxu0 0.0
        %1253 = vmatprep.subr.mxu0 0.0
        %1254 = vmatpush2.msra.mxu0 0.0
        %1255 = vmatprep.subr.mxu0 0.0
        %1256 = vmatpush2.msra.mxu0 0.0
        %1257 = vmatprep.subr.mxu0 0.0
        %1258 = vmatpush2.msra.mxu0 0.0
        %1259 = vmatprep.subr.mxu0 0.0
        %1260 = vmatpush2.msra.mxu0 0.0
        %1261 = vmatprep.subr.mxu0 0.0
        %1262 = vmatpush2.msra.mxu0 0.0
        %1263 = vmatprep.subr.mxu0 0.0
        %1264 = vmatpush2.msra.mxu0 0.0
        %1265 = vmatprep.subr.mxu0 0.0
        %1266 = vmatpush2.msra.mxu0 0.0
        %1267 = vmatprep.subr.mxu0 0.0
        %1268 = vmatpush2.msra.mxu0 0.0
        %1269 = vmatprep.subr.mxu0 0.0
        %1270 = vmatpush2.msra.mxu0 0.0
        %1271 = vmatprep.subr.mxu0 0.0
        %1272 = vmatpush2.msra.mxu0 0.0
        %1273 = vmatprep.subr.mxu0 0.0
        %1274 = vmatpush2.msra.mxu0 0.0
        %1275 = vmatprep.subr.mxu0 0.0
        %1276 = vmatpush2.msra.mxu0 0.0
        %1277 = vmatprep.mubr.f32.mxu0 0.0
        %1278 = vmatmul.mubr.f32.gmra.mxu0 %v1211
        %v1279 = vpop.f32.mrf.mxu0
        %v1280 = vadd.f32 0.0, %v1279
        %v1281 = vpop.f32.mrf.mxu0
        %v1282 = vadd.f32 0.0, %v1281
        %1283 = vdwg.mxu0
        %1284 = vmatprep.subr.mxu0 0.0
        %1285 = vmatpush1.msra.mxu0 0.0
        %1286 = vmatprep.subr.mxu0 0.0
        %1287 = vmatpush1.msra.mxu0 0.0
        %1288 = vmatprep.subr.mxu0 0.0
        %1289 = vmatpush1.msra.mxu0 0.0
        %1290 = vmatprep.subr.mxu0 0.0
        %1291 = vmatpush1.msra.mxu0 0.0
        %1292 = vmatprep.subr.mxu0 0.0
        %1293 = vmatpush1.msra.mxu0 0.0
        %1294 = vmatprep.subr.mxu0 0.0
        %1295 = vmatpush1.msra.mxu0 0.0
        %1296 = vmatprep.subr.mxu0 0.0
        %1297 = vmatpush1.msra.mxu0 0.0
        %1298 = vmatprep.subr.mxu0 0.0
        %1299 = vmatpush1.msra.mxu0 0.0
        %1300 = vmatprep.subr.mxu0 0.0
        %1301 = vmatpush1.msra.mxu0 0.0
        %1302 = vmatprep.subr.mxu0 0.0
        %1303 = vmatpush1.msra.mxu0 0.0
        %1304 = vmatprep.subr.mxu0 0.0
        %1305 = vmatpush1.msra.mxu0 0.0
        %1306 = vmatprep.subr.mxu0 0.0
        %1307 = vmatpush1.msra.mxu0 %v1207
        %1308 = vmatprep.subr.mxu0 0.0
        %1309 = vmatpush1.msra.mxu0 %v1204
        %1310 = vmatprep.subr.mxu0 0.0
        %1311 = vmatpush1.msra.mxu0 %v1201
        %1312 = vmatprep.subr.mxu0 0.0
        %1313 = vmatpush1.msra.mxu0 %v1198
        %1314 = vmatprep.subr.mxu0 0.0
        %1315 = vmatpush1.msra.mxu0 %v1195
        %1316 = vmatprep.subr.mxu0 0.0
        %1317 = vmatpush2.msra.mxu0 0.0
        %1318 = vmatprep.subr.mxu0 0.0
        %1319 = vmatpush2.msra.mxu0 0.0
        %1320 = vmatprep.subr.mxu0 0.0
        %1321 = vmatpush2.msra.mxu0 0.0
        %1322 = vmatprep.subr.mxu0 0.0
        %1323 = vmatpush2.msra.mxu0 0.0
        %1324 = vmatprep.subr.mxu0 0.0
        %1325 = vmatpush2.msra.mxu0 0.0
        %1326 = vmatprep.subr.mxu0 0.0
        %1327 = vmatpush2.msra.mxu0 0.0
        %1328 = vmatprep.subr.mxu0 0.0
        %1329 = vmatpush2.msra.mxu0 0.0
        %1330 = vmatprep.subr.mxu0 0.0
        %1331 = vmatpush2.msra.mxu0 0.0
        %1332 = vmatprep.subr.mxu0 0.0
        %1333 = vmatpush2.msra.mxu0 0.0
        %1334 = vmatprep.subr.mxu0 0.0
        %1335 = vmatpush2.msra.mxu0 0.0
        %1336 = vmatprep.subr.mxu0 0.0
        %1337 = vmatpush2.msra.mxu0 0.0
        %1338 = vmatprep.subr.mxu0 0.0
        %1339 = vmatpush2.msra.mxu0 0.0
        %1340 = vmatprep.subr.mxu0 0.0
        %1341 = vmatpush2.msra.mxu0 0.0
        %1342 = vmatprep.subr.mxu0 0.0
        %1343 = vmatpush2.msra.mxu0 0.0
        %1344 = vmatprep.subr.mxu0 0.0
        %1345 = vmatpush2.msra.mxu0 0.0
        %1346 = vmatprep.subr.mxu0 0.0
        %1347 = vmatpush2.msra.mxu0 0.0
        %1348 = vmatprep.mubr.f32.mxu0 0.0
        %1349 = vmatmul.mubr.f32.gmra.mxu0 %v1211
        %v1350 = vpop.f32.mrf.mxu0
        %v1351 = vadd.f32 0.0, %v1350
        %v1352 = vpop.f32.mrf.mxu0
        %1353 = vdwg.mxu0
        %vm1354 = vcmask 64512
        %v1356 = vsel %vm1354, %v1208, 0
        %1358 = vmatprep.subr.mxu0 0.0
        %1359 = vmatpush1.msra.mxu0 0.0
        %1360 = vmatprep.subr.mxu0 0.0
        %1361 = vmatpush1.msra.mxu0 0.0
        %1362 = vmatprep.subr.mxu0 0.0
        %1363 = vmatpush1.msra.mxu0 0.0
        %1364 = vmatprep.subr.mxu0 0.0
        %1365 = vmatpush1.msra.mxu0 0.0
        %1366 = vmatprep.subr.mxu0 0.0
        %1367 = vmatpush1.msra.mxu0 0.0
        %1368 = vmatprep.subr.mxu0 0.0
        %1369 = vmatpush1.msra.mxu0 0.0
        %1370 = vmatprep.subr.mxu0 0.0
        %1371 = vmatpush1.msra.mxu0 0.0
        %1372 = vmatprep.subr.mxu0 0.0
        %1373 = vmatpush1.msra.mxu0 0.0
        %1374 = vmatprep.subr.mxu0 0.0
        %1375 = vmatpush1.msra.mxu0 0.0
        %1376 = vmatprep.subr.mxu0 0.0
        %1377 = vmatpush1.msra.mxu0 0.0
        %1378 = vmatprep.subr.mxu0 0.0
        %1379 = vmatpush1.msra.mxu0 0.0
        %1380 = vmatprep.subr.mxu0 0.0
        %1381 = vmatpush1.msra.mxu0 0.0
        %1382 = vmatprep.subr.mxu0 0.0
        %1383 = vmatpush1.msra.mxu0 0.0
        %1384 = vmatprep.subr.mxu0 0.0
        %1385 = vmatpush1.msra.mxu0 0.0
        %1386 = vmatprep.subr.mxu0 0.0
        %1387 = vmatpush1.msra.mxu0 0.0
        %1388 = vmatprep.subr.mxu0 %v1161
        %1389 = vmatpush1.msra.mxu0 %v1160
        %1390 = vmatprep.subr.mxu0 0.0
        %1391 = vmatpush2.msra.mxu0 0.0
        %1392 = vmatprep.subr.mxu0 0.0
        %1393 = vmatpush2.msra.mxu0 0.0
        %1394 = vmatprep.subr.mxu0 0.0
        %1395 = vmatpush2.msra.mxu0 0.0
        %1396 = vmatprep.subr.mxu0 0.0
        %1397 = vmatpush2.msra.mxu0 0.0
        %1398 = vmatprep.subr.mxu0 0.0
        %1399 = vmatpush2.msra.mxu0 0.0
        %1400 = vmatprep.subr.mxu0 0.0
        %1401 = vmatpush2.msra.mxu0 0.0
        %1402 = vmatprep.subr.mxu0 0.0
        %1403 = vmatpush2.msra.mxu0 0.0
        %1404 = vmatprep.subr.mxu0 0.0
        %1405 = vmatpush2.msra.mxu0 0.0
        %1406 = vmatprep.subr.mxu0 0.0
        %1407 = vmatpush2.msra.mxu0 0.0
        %1408 = vmatprep.subr.mxu0 0.0
        %1409 = vmatpush2.msra.mxu0 0.0
        %1410 = vmatprep.subr.mxu0 0.0
        %1411 = vmatpush2.msra.mxu0 0.0
        %1412 = vmatprep.subr.mxu0 0.0
        %1413 = vmatpush2.msra.mxu0 0.0
        %1414 = vmatprep.subr.mxu0 0.0
        %1415 = vmatpush2.msra.mxu0 0.0
        %1416 = vmatprep.subr.mxu0 0.0
        %1417 = vmatpush2.msra.mxu0 0.0
        %1418 = vmatprep.subr.mxu0 0.0
        %1419 = vmatpush2.msra.mxu0 0.0
        %1420 = vmatprep.subr.mxu0 0.0
        %1421 = vmatpush2.msra.mxu0 0.0
        %1422 = vmatprep.mubr.f32.mxu0 0.0
        %1423 = vmatmul.mubr.f32.gmra.mxu0 %v1356
        %v1424 = vpop.f32.mrf.mxu0
        %v1425 = vadd.f32 %v1280, %v1424
        %v1426 = vpop.f32.mrf.mxu0
        %v1427 = vadd.f32 %v1282, %v1426
        %1428 = vdwg.mxu0
        %1429 = vmatprep.subr.mxu0 0.0
        %1430 = vmatpush1.msra.mxu0 0.0
        %1431 = vmatprep.subr.mxu0 0.0
        %1432 = vmatpush1.msra.mxu0 0.0
        %1433 = vmatprep.subr.mxu0 0.0
        %1434 = vmatpush1.msra.mxu0 0.0
        %1435 = vmatprep.subr.mxu0 0.0
        %1436 = vmatpush1.msra.mxu0 0.0
        %1437 = vmatprep.subr.mxu0 0.0
        %1438 = vmatpush1.msra.mxu0 0.0
        %1439 = vmatprep.subr.mxu0 0.0
        %1440 = vmatpush1.msra.mxu0 0.0
        %1441 = vmatprep.subr.mxu0 0.0
        %1442 = vmatpush1.msra.mxu0 0.0
        %1443 = vmatprep.subr.mxu0 0.0
        %1444 = vmatpush1.msra.mxu0 0.0
        %1445 = vmatprep.subr.mxu0 0.0
        %1446 = vmatpush1.msra.mxu0 0.0
        %1447 = vmatprep.subr.mxu0 0.0
        %1448 = vmatpush1.msra.mxu0 0.0
        %1449 = vmatprep.subr.mxu0 0.0
        %1450 = vmatpush1.msra.mxu0 0.0
        %1451 = vmatprep.subr.mxu0 0.0
        %1452 = vmatpush1.msra.mxu0 0.0
        %1453 = vmatprep.subr.mxu0 0.0
        %1454 = vmatpush1.msra.mxu0 0.0
        %1455 = vmatprep.subr.mxu0 0.0
        %1456 = vmatpush1.msra.mxu0 0.0
        %1457 = vmatprep.subr.mxu0 0.0
        %1458 = vmatpush1.msra.mxu0 0.0
        %1459 = vmatprep.subr.mxu0 0.0
        %1460 = vmatpush1.msra.mxu0 %v1162
        %1461 = vmatprep.subr.mxu0 0.0
        %1462 = vmatpush2.msra.mxu0 0.0
        %1463 = vmatprep.subr.mxu0 0.0
        %1464 = vmatpush2.msra.mxu0 0.0
        %1465 = vmatprep.subr.mxu0 0.0
        %1466 = vmatpush2.msra.mxu0 0.0
        %1467 = vmatprep.subr.mxu0 0.0
        %1468 = vmatpush2.msra.mxu0 0.0
        %1469 = vmatprep.subr.mxu0 0.0
        %1470 = vmatpush2.msra.mxu0 0.0
        %1471 = vmatprep.subr.mxu0 0.0
        %1472 = vmatpush2.msra.mxu0 0.0
        %1473 = vmatprep.subr.mxu0 0.0
        %1474 = vmatpush2.msra.mxu0 0.0
        %1475 = vmatprep.subr.mxu0 0.0
        %1476 = vmatpush2.msra.mxu0 0.0
        %1477 = vmatprep.subr.mxu0 0.0
        %1478 = vmatpush2.msra.mxu0 0.0
        %1479 = vmatprep.subr.mxu0 0.0
        %1480 = vmatpush2.msra.mxu0 0.0
        %1481 = vmatprep.subr.mxu0 0.0
        %1482 = vmatpush2.msra.mxu0 0.0
        %1483 = vmatprep.subr.mxu0 0.0
        %1484 = vmatpush2.msra.mxu0 0.0
        %1485 = vmatprep.subr.mxu0 0.0
        %1486 = vmatpush2.msra.mxu0 0.0
        %1487 = vmatprep.subr.mxu0 0.0
        %1488 = vmatpush2.msra.mxu0 0.0
        %1489 = vmatprep.subr.mxu0 0.0
        %1490 = vmatpush2.msra.mxu0 0.0
        %1491 = vmatprep.subr.mxu0 0.0
        %1492 = vmatpush2.msra.mxu0 0.0
        %1493 = vmatprep.mubr.f32.mxu0 0.0
        %1494 = vmatmul.mubr.f32.gmra.mxu0 %v1356
        %v1495 = vpop.f32.mrf.mxu0
        %v1496 = vadd.f32 %v1351, %v1495
        %v1497 = vpop.f32.mrf.mxu0
        %1498 = vdwg.mxu0
        %v1499 = vld [vmem:[#allocation2] sm:$0x1]
        %1501 = vset.pattern.permute.xlu0 0
        %1502 = vperm.xlu0 %1501, %v1499
        %v1503 = vpop.permute.xlu0 %1502
        %v1505 = vlaneseq
        %v1506 = vshrl.u32 %v1505, 7
        %v1507 = vsub.s32 0, %v1506
        %v1508 = vrot.slane %v1503, %v1507
        %v1509 = vadd.f32 %v1425, %v1508
        %v1510 = vadd.f32 %v1427, %v1508
        %v1511 = vadd.f32 %v1496, %v1508
        %v1512 = vxor.u32 %v1509, 2147483648
        %v1513 = vxor.u32 %v1510, 2147483648
        %v1514 = vxor.u32 %v1511, 2147483648
        %v1515 = vmul.f32 %v1512, 1.442695
        %v1516 = vpow.pop %v1515
        %v1517 = vmul.f32 %v1513, 1.442695
        %v1518 = vpow.pop %v1517
        %v1519 = vmul.f32 %v1514, 1.442695
        %v1520 = vpow.pop %v1519
        %v1521 = vadd.f32 %v1516, 1.0
        %v1522 = vadd.f32 %v1518, 1.0
        %v1523 = vadd.f32 %v1520, 1.0
        %v1524 = vrcp.pop %v1521
        %v1525 = vmul.f32 1.0, %v1524
        %v1526 = vrcp.pop %v1522
        %v1527 = vmul.f32 1.0, %v1526
        %v1528 = vrcp.pop %v1523
        %v1529 = vmul.f32 1.0, %v1528
        %v1533 = vcombine.low %v1525, %v1527
        %v1535 = vunpack.c.l.s4 1966171168
        %v1536 = vunpack.c.0.s8 %v1535
        %v1537 = vlaneseq
        %v1538 = vshrl.u32 %v1537, 7
        %v1539 = vsub.s32 %v1536, %v1538
        %v1540 = vrot.slane %v1533, %v1539
        %v1542 = vunpack.c.l.s4 1966171168
        %v1543 = vunpack.c.0.s8 %v1542
        %v1544 = vlaneseq
        %v1545 = vshrl.u32 %v1544, 7
        %v1546 = vsub.s32 %v1543, %v1545
        %v1547 = vrot.slane %v1529, %v1546
        %v1548 = vcombine.low %v1540, %v1547
        %v1550 = vunpack.c.l.s4 1966171168
        %v1551 = vunpack.c.0.s8 %v1550
        %v1552 = vlaneseq
        %v1553 = vshrl.u32 %v1552, 7
        %v1554 = vsub.s32 %v1551, %v1553
        %v1555 = vrot.slane %v1548, %v1554
        %v1557 = vlaneseq
        %vm1558 = vcmp.ge.s32.totalorder %v1557, 0
        %vm1559 = vcmp.lt.s32.totalorder %v1557, 384
        %vm1560 = vmand %vm1558, %vm1559
        %1561 = vst.msk [vmem:[%s531] sm:$0x7] %vm1560, %v1555
        %s1562 = smul.u32 3, %s25
        %p1563 = scmp.lt.s32.totalorder %s1562, 5
        %s1564 = scalar_select %p1563, %s1562, 5
        %s1565 = scalar_lea.vmem %s12, %s1564
        // Predicated region
        $region121: #{neumf_forward.1} parent=111 // pred_check
          %p1566 = pneg %p305
        $region122: #{neumf_forward.1} parent=111 // pred_check_branch
          %1568 = sbr.rel (%p1566) target = $region124
        $region123: #{neumf_forward.1} parent=111 // pred_region
          %s1569 = smul.u32 3, %s25
        $region124: #{neumf_forward.1} parent=111 // pred_fallthru
          _
      $region112: #{neumf_forward.1} parent=5 // pred_fallthru
        _
      %p1570 = scmp.le.s32.totalorder 2, %s20
      // Predicated region
      $region125: #{neumf_forward.1} parent=5 // pred_check
        %p1571 = pneg %p1570
      $region126: #{neumf_forward.1} parent=5 // pred_check_branch
        %1573 = sbr.rel (%p1571) target = $region128
      $region127: #{neumf_forward.1} parent=5 // pred_region
        %s1574 = ssub.s32 %s20, 2
        // Predicated region
        $region129: #{neumf_forward.1} parent=127 // pred_check
          %p1575 = pneg %p311
        $region130: #{neumf_forward.1} parent=127 // pred_check_branch
          %1577 = sbr.rel (%p1575) target = $region132
        $region131: #{neumf_forward.1} parent=127 // pred_region
          %s1578 = smul.u32 3, %s26
          %p1579 = scmp.lt.s32.totalorder %s1578, 5
          %s1580 = scalar_select %p1579, %s1578, 5
          %s1581 = scalar_lea.vmem %s12, %s1580
        $region132: #{neumf_forward.1} parent=127 // pred_fallthru
          _
      $region128: #{neumf_forward.1} parent=5 // pred_fallthru
        _
    $region6: #{neumf_forward.1} parent=1 // loop_footer
      %s24 = sadd.s32 1, %s20
    $region7: #{neumf_forward.1} parent=1 // loop_footer_branch
      %19 = sbr.rel target = $region3
    $region8: #{neumf_forward.1} parent=1 // loop_exit
      _

</llo_original>
